<compile_context>
chip_gen: v5e
topology: v5e:2x2
jax: 0.10.0
libtpu: 0.0.40
codegen_flags: <defaults>
</compile_context>

<pallas_src>
import functools

import jax
import jax.numpy as jnp
import numpy as np
from jax import lax
from jax.experimental import pallas as pl
from jax.experimental.pallas import tpu as pltpu


# ---------------------------------------------------------------------------
# Kernel 1: fused QKV projection (single GEMM) + per-head RoPE.
# ---------------------------------------------------------------------------
def qkv_rope_kernel(x_ref, w_ref, cos_ref, sin_ref, q_ref, k_ref, v_ref,
                    *, n_heads, head_dim, dim):
    x = x_ref[...]                                         # [ts, D] compute dtype
    # Single fused QKV projection; wq columns already carry 1/sqrt(head_dim)
    # and the per-head rotate_half column permutation (done on the host).
    qkv = jnp.dot(x, w_ref[...], preferred_element_type=jnp.float32)   # [ts, 3D]
    cos = cos_ref[...]                                     # [ts, hd/2] f32
    sin = sin_ref[...]
    hd2 = head_dim // 2
    for h in range(n_heads):
        b0 = h * head_dim
        q_re = qkv[:, b0:b0 + hd2]
        q_im = qkv[:, b0 + hd2:b0 + head_dim]
        k_re = qkv[:, dim + b0:dim + b0 + hd2]
        k_im = qkv[:, dim + b0 + hd2:dim + b0 + head_dim]
        # Per-head block writes are contiguous [ts, head_dim] stores.
        q_ref[h] = jnp.concatenate(
            [q_re * cos - q_im * sin, q_re * sin + q_im * cos],
            axis=-1).astype(q_ref.dtype)
        k_ref[h] = jnp.concatenate(
            [k_re * cos - k_im * sin, k_re * sin + k_im * cos],
            axis=-1).astype(k_ref.dtype)
        v_ref[h] = qkv[:, 2 * dim + b0:2 * dim + b0 + head_dim].astype(v_ref.dtype)


# ---------------------------------------------------------------------------
# Kernel 2: flash-style attention (online softmax, heads batched) + fused wo.
# ---------------------------------------------------------------------------
def flash_attn_kernel(q_ref, k_ref, v_ref, wo_ref, o_ref,
                      m_ref, l_ref, acc_ref, *, tq, tk, exp_dtype):
    qi = pl.program_id(1)
    ki = pl.program_id(2)
    n_heads, _, head_dim = q_ref.shape
    q_start = qi * tq
    k_start = ki * tk

    @pl.when(ki == 0)
    def _init():
        m_ref[...] = jnp.full_like(m_ref, -1e30)
        l_ref[...] = jnp.zeros_like(l_ref)
        acc_ref[...] = jnp.zeros_like(acc_ref)

    def process(apply_mask):
        q = q_ref[...]                                     # [H, tq, hd]
        k = k_ref[...]                                     # [H, tk, hd]
        v = v_ref[...]                                     # [H, tk, hd]
        # All heads in one batched contraction, K = head_dim (scale already in q).
        s = jnp.einsum('hqd,hkd->hqk', q, k,
                       preferred_element_type=jnp.float32)   # [H, tq, tk]
        if apply_mask:
            row = q_start + lax.broadcasted_iota(jnp.int32, (tq, tk), 0)
            col = k_start + lax.broadcasted_iota(jnp.int32, (tq, tk), 1)
            s = jnp.where((row >= col)[None], s, -1e30)
        m_prev = m_ref[...]                                # [H, tq, 1]
        l_prev = l_ref[...]
        m_new = jnp.maximum(m_prev, jnp.max(s, axis=-1, keepdims=True))
        alpha = jnp.exp(m_prev - m_new)
        # exp argument in bf16 on the bf16 path (EUP throughput);
        # max / rescale / l accumulation stay f32.
        p = jnp.exp((s - m_new).astype(exp_dtype))         # [H, tq, tk]
        l_ref[...] = alpha * l_prev + jnp.sum(p.astype(jnp.float32), axis=-1,
                                              keepdims=True)
        m_ref[...] = m_new
        pv = jnp.einsum('hqk,hkd->hqd', p.astype(v.dtype), v,
                        preferred_element_type=jnp.float32)  # [H, tq, hd]
        acc_ref[...] = alpha * acc_ref[...] + pv

    # Strictly-lower tiles: no iota / select needed.
    @pl.when(q_start >= k_start + tk - 1)
    def _interior():
        process(apply_mask=False)

    # Diagonal-crossing tiles: build the causal mask in-kernel.
    @pl.when(jnp.logical_and(q_start + tq - 1 >= k_start,
                             q_start < k_start + tk - 1))
    def _crossing():
        process(apply_mask=True)

    # Fully-masked tiles (k_start > q_start + tq - 1): no compute; their k/v
    # DMA is also skipped by the clamped index_map in the wrapper.

    @pl.when(ki == pl.num_programs(2) - 1)
    def _finalize():
        inv_l = pl.reciprocal(l_ref[...], approx=True)     # [H, tq, 1] (EUP)
        acc = (acc_ref[...] * inv_l).astype(wo_ref.dtype)  # [H, tq, hd]
        # Fused output projection: out = sum_h acc_h @ wo_h (lane-dense store).
        out = jnp.dot(acc[0], wo_ref[0], preferred_element_type=jnp.float32)
        for h in range(1, n_heads):
            out = out + jnp.dot(acc[h], wo_ref[h],
                                preferred_element_type=jnp.float32)
        o_ref[...] = out.astype(o_ref.dtype)


# ---------------------------------------------------------------------------
# Host-side wrapper.
# ---------------------------------------------------------------------------
def _rope_permutation(dim, n_heads):
    """Per-head-contiguous rotate_half permutation: inside each head's block of
    head_dim columns, the first half holds the original even (real) columns and
    the second half the original odd (imag) columns."""
    hd = dim // n_heads
    hd2 = hd // 2
    perm = np.empty((dim,), dtype=np.int64)
    for h in range(n_heads):
        base = h * hd
        for j in range(hd2):
            perm[base + j] = base + 2 * j
            perm[base + hd2 + j] = base + 2 * j + 1
    return perm


def _pick_tile(s, preferred):
    return preferred if (s >= preferred and s % preferred == 0) else s


def attention_pallas(x, wq, wk, wv, wo, cos, sin, n_heads, *,
                     compute_dtype=jnp.bfloat16,
                     ts=256, tq=256, tk=512,
                     vmem_limit_bytes=64 * 1024 * 1024,
                     bf16_exp=None):
    """x: [B,S,D]; wq/wk/wv/wo: [D,D] (PyTorch nn.Linear layout, y = x @ W.T);
    cos/sin: [S, head_dim//2] RoPE tables.  The causal mask is generated
    in-kernel (standard LLaMA decoder mask).

    Per-chip tuning (from the perf review): v6e ts=256/tq=256/tk=512 and
    vmem_limit ~64-100 MiB (defaults); v5e tq=128/tk=256, bf16_exp=False;
    v7x vmem_limit ~48 MiB and tk=256.
    """
    B, S, D = x.shape
    head_dim = D // n_heads
    out_dtype = x.dtype
    scale = head_dim ** -0.5

    ts = _pick_tile(S, ts)
    tq = _pick_tile(S, tq)
    tk = _pick_tile(S, tk)

    if bf16_exp is None:
        bf16_exp = jnp.dtype(compute_dtype) == jnp.dtype(jnp.bfloat16)
    exp_dtype = jnp.bfloat16 if bf16_exp else jnp.float32

    # ---- host-side prep: fused / pre-transposed / RoPE-permuted weights. ----
    perm = _rope_permutation(D, n_heads)
    wq_t = (jnp.asarray(wq) * scale)[perm, :].T            # scale folded into wq
    wk_t = jnp.asarray(wk)[perm, :].T
    wv_t = jnp.asarray(wv).T
    wqkv_t = jnp.concatenate([wq_t, wk_t, wv_t], axis=1).astype(compute_dtype)
    wo3 = jnp.asarray(wo).T.reshape(n_heads, head_dim, D).astype(compute_dtype)
    x_c = x.astype(compute_dtype)
    cos_f = jnp.asarray(cos, dtype=jnp.float32)             # [S, head_dim//2]
    sin_f = jnp.asarray(sin, dtype=jnp.float32)

    # ---- kernel 1: fused QKV GEMM + RoPE -> q/k/v as [B, H, S, hd] ----------
    n_s = S // ts
    q, k, v = pl.pallas_call(
        functools.partial(qkv_rope_kernel, n_heads=n_heads,
                          head_dim=head_dim, dim=D),
        out_shape=tuple(
            jax.ShapeDtypeStruct((B, n_heads, S, head_dim), compute_dtype)
            for _ in range(3)),
        grid_spec=pltpu.PrefetchScalarGridSpec(
            num_scalar_prefetch=0,
            grid=(B, n_s),
            in_specs=[
                pl.BlockSpec((None, ts, D), lambda b, s: (b, s, 0)),        # x
                pl.BlockSpec((D, 3 * D), lambda b, s: (0, 0)),              # wqkv
                pl.BlockSpec((ts, head_dim // 2), lambda b, s: (s, 0)),     # cos
                pl.BlockSpec((ts, head_dim // 2), lambda b, s: (s, 0)),     # sin
            ],
            out_specs=[
                pl.BlockSpec((None, n_heads, ts, head_dim),
                             lambda b, s: (b, 0, s, 0))
            ] * 3,
        ),
        compiler_params=pltpu.CompilerParams(
            dimension_semantics=("parallel", "parallel"),
            vmem_limit_bytes=vmem_limit_bytes),
    )(x_c, wqkv_t, cos_f, sin_f)

    # ---- kernel 2: flash attention + fused wo projection --------------------
    n_q = S // tq
    n_kv = S // tk

    def kv_index_map(b, i, j):
        # Clamp causally-dead kv steps onto the last useful block so Pallas
        # skips their DMA (compute is skipped by pl.when inside the kernel).
        j_last = (i * tq + tq - 1) // tk
        return (b, 0, jnp.minimum(j, j_last), 0)

    out = pl.pallas_call(
        functools.partial(flash_attn_kernel, tq=tq, tk=tk, exp_dtype=exp_dtype),
        out_shape=jax.ShapeDtypeStruct((B, S, D), out_dtype),
        grid_spec=pltpu.PrefetchScalarGridSpec(
            num_scalar_prefetch=0,
            grid=(B, n_q, n_kv),
            in_specs=[
                pl.BlockSpec((None, n_heads, tq, head_dim),
                             lambda b, i, j: (b, 0, i, 0)),                 # q
                pl.BlockSpec((None, n_heads, tk, head_dim), kv_index_map),  # k
                pl.BlockSpec((None, n_heads, tk, head_dim), kv_index_map),  # v
                pl.BlockSpec((n_heads, head_dim, D),
                             lambda b, i, j: (0, 0, 0)),                    # wo
            ],
            out_specs=pl.BlockSpec((None, tq, D), lambda b, i, j: (b, i, 0)),
            scratch_shapes=[
                pltpu.VMEM((n_heads, tq, 1), jnp.float32),         # running max m
                pltpu.VMEM((n_heads, tq, 1), jnp.float32),         # running sum l
                pltpu.VMEM((n_heads, tq, head_dim), jnp.float32),  # accumulator
            ],
        ),
        compiler_params=pltpu.CompilerParams(
            dimension_semantics=("parallel", "parallel", "arbitrary"),
            vmem_limit_bytes=vmem_limit_bytes),
    )(q, k, v, wo3)
    return out


# ---------------------------------------------------------------------------
# Pure-JAX reference (transcription of the PyTorch forward) for verification.
# ---------------------------------------------------------------------------
def attention_reference(x, wq, wk, wv, wo, cos, sin, mask, n_heads):
    B, S, D = x.shape
    hd = D // n_heads
    xq = (x @ wq.T).reshape(B, S, n_heads, hd)
    xk = (x @ wk.T).reshape(B, S, n_heads, hd)
    xv = (x @ wv.T).reshape(B, S, n_heads, hd)

    c = cos[None, :, None, :]       # [1, S, 1, hd//2]
    s = sin[None, :, None, :]

    def rope(t):
        t2 = t.reshape(B, S, n_heads, hd // 2, 2)
        re = t2[..., 0] * c - t2[..., 1] * s
        im = t2[..., 0] * s + t2[..., 1] * c
        return jnp.stack([re, im], axis=-1).reshape(B, S, n_heads, hd)

    xq, xk = rope(xq), rope(xk)
    xq = xq.transpose(0, 2, 1, 3)
    xk = xk.transpose(0, 2, 1, 3)
    xv = xv.transpose(0, 2, 1, 3)
    scores = jnp.einsum('bhqd,bhkd->bhqk', xq, xk) * (hd ** -0.5) + mask
    p = jax.nn.softmax(scores.astype(jnp.float32), axis=-1)
    out = jnp.einsum('bhqk,bhkd->bhqd', p, xv)
    out = out.transpose(0, 2, 1, 3).reshape(B, S, D)
    return out @ wo.T


if __name__ == "__main__":
    # Small but representative shapes: head_dim=128 exercises the (8,128)
    # tiling, bf16 packing and the multi-tile causal grid paths.
    B, S, D, n_heads = 2, 256, 256, 2
    hd = D // n_heads

    key = jax.random.PRNGKey(0)
    kx, kq, kk, kv_, ko = jax.random.split(key, 5)
    x = jax.random.normal(kx, (B, S, D), dtype=jnp.float32)
    init_scale = 1.0 / np.sqrt(D)
    wq = jax.random.normal(kq, (D, D), dtype=jnp.float32) * init_scale
    wk = jax.random.normal(kk, (D, D), dtype=jnp.float32) * init_scale
    wv = jax.random.normal(kv_, (D, D), dtype=jnp.float32) * init_scale
    wo = jax.random.normal(ko, (D, D), dtype=jnp.float32) * init_scale

    # freqs_cis = exp(i * t * theta^{-2j/hd}) represented as cos / sin tables.
    theta = 10000.0
    freqs = 1.0 / (theta ** (np.arange(0, hd, 2, dtype=np.float32) / hd))  # [hd//2]
    t = np.arange(S, dtype=np.float32)
    ang = np.outer(t, freqs)                                               # [S, hd//2]
    cos = jnp.asarray(np.cos(ang), dtype=jnp.float32)
    sin = jnp.asarray(np.sin(ang), dtype=jnp.float32)

    # Causal additive mask (what the PyTorch module would receive).
    causal = jnp.asarray(np.triu(np.full((S, S), -1e9, dtype=np.float32), k=1))
    ref = attention_reference(x, wq, wk, wv, wo, cos, sin, causal, n_heads)

    # 1) f32 compute path, small tiles -> exercises interior / crossing /
    #    causally-dead (DMA-clamped) tiles and multi-step online softmax.
    out_f32 = attention_pallas(x, wq, wk, wv, wo, cos, sin, n_heads,
                               compute_dtype=jnp.float32,
                               ts=128, tq=128, tk=128)
    out_f32 = jax.block_until_ready(out_f32)
    np.testing.assert_allclose(np.asarray(out_f32), np.asarray(ref),
                               rtol=1e-2, atol=1e-2)

    # 2) bf16 MXU path with default (perf) tile sizes: looser tolerance.
    out_bf16 = attention_pallas(x, wq, wk, wv, wo, cos, sin, n_heads,
                                compute_dtype=jnp.bfloat16)
    out_bf16 = jax.block_until_ready(out_bf16)
    np.testing.assert_allclose(np.asarray(out_bf16), np.asarray(ref),
                               rtol=1e-1, atol=1e-1)

    print("KERNEL_OK")
</pallas_src>

<mosaic_0001>
module attributes {stable_mosaic.version = 11 : i64} {
  func.func @qkv_rope_kernel(%arg0: i32, %arg1: i32, %arg2: memref<1x128x256xf32, #tpu.memory_space<vmem>>, %arg3: memref<256x768xf32, #tpu.memory_space<vmem>>, %arg4: memref<128x64xf32, #tpu.memory_space<vmem>>, %arg5: memref<128x64xf32, #tpu.memory_space<vmem>>, %arg6: memref<1x2x128x128xf32, #tpu.memory_space<vmem>>, %arg7: memref<1x2x128x128xf32, #tpu.memory_space<vmem>>, %arg8: memref<1x2x128x128xf32, #tpu.memory_space<vmem>>) attributes {dimension_semantics = [#tpu.dimension_semantics<parallel>, #tpu.dimension_semantics<parallel>], iteration_bounds = array<i64: 2, 2>, scalar_prefetch = 0 : i64, scratch_operands = 0 : i64, tpu.core_type = #tpu.core_type<tc>, window_params = [{transform_indices = @transform_0, window_bounds = array<i64: 1, 128, 256>}, {pipeline_mode = #tpu.pipeline_mode<synchronous>, transform_indices = @transform_1, window_bounds = array<i64: 256, 768>}, {transform_indices = @transform_2, window_bounds = array<i64: 128, 64>}, {transform_indices = @transform_3, window_bounds = array<i64: 128, 64>}, {transform_indices = @transform_4, window_bounds = array<i64: 1, 2, 128, 128>}, {transform_indices = @transform_5, window_bounds = array<i64: 1, 2, 128, 128>}, {transform_indices = @transform_6, window_bounds = array<i64: 1, 2, 128, 128>}]} {
    %c0 = arith.constant 0 : index
    %c0_0 = arith.constant 0 : index
    %c0_1 = arith.constant 0 : index
    %0 = vector.load %arg2[%c0, %c0_0, %c0_1] : memref<1x128x256xf32, #tpu.memory_space<vmem>>, vector<1x128x256xf32>
    %1 = vector.shape_cast %0 : vector<1x128x256xf32> to vector<128x256xf32>
    %c0_2 = arith.constant 0 : index
    %c0_3 = arith.constant 0 : index
    %2 = vector.load %arg3[%c0_2, %c0_3] : memref<256x768xf32, #tpu.memory_space<vmem>>, vector<256x768xf32>
    %cst = arith.constant dense<0.000000e+00> : vector<128x768xf32>
    %3 = tpu.matmul %1, %2, %cst {dimension_numbers = #tpu.dot_dimension_numbers<[1], [0], [0], [1], [0, 0, 1, 1], [], []>} : vector<128x256xf32>, vector<256x768xf32>, vector<128x768xf32> -> vector<128x768xf32>
    %c0_4 = arith.constant 0 : index
    %c0_5 = arith.constant 0 : index
    %4 = vector.load %arg4[%c0_4, %c0_5] : memref<128x64xf32, #tpu.memory_space<vmem>>, vector<128x64xf32>
    %c0_6 = arith.constant 0 : index
    %c0_7 = arith.constant 0 : index
    %5 = vector.load %arg5[%c0_6, %c0_7] : memref<128x64xf32, #tpu.memory_space<vmem>>, vector<128x64xf32>
    %6 = vector.extract_strided_slice %3 {offsets = [0, 0], sizes = [128, 64], strides = [1, 1]} : vector<128x768xf32> to vector<128x64xf32>
    %7 = vector.extract_strided_slice %3 {offsets = [0, 64], sizes = [128, 64], strides = [1, 1]} : vector<128x768xf32> to vector<128x64xf32>
    %8 = vector.extract_strided_slice %3 {offsets = [0, 256], sizes = [128, 64], strides = [1, 1]} : vector<128x768xf32> to vector<128x64xf32>
    %9 = vector.extract_strided_slice %3 {offsets = [0, 320], sizes = [128, 64], strides = [1, 1]} : vector<128x768xf32> to vector<128x64xf32>
    %10 = arith.mulf %6, %4 : vector<128x64xf32>
    %11 = arith.mulf %7, %5 : vector<128x64xf32>
    %12 = arith.subf %10, %11 : vector<128x64xf32>
    %13 = arith.mulf %6, %5 : vector<128x64xf32>
    %14 = arith.mulf %7, %4 : vector<128x64xf32>
    %15 = arith.addf %13, %14 : vector<128x64xf32>
    %16 = tpu.concatenate %12, %15 in 1 : vector<128x64xf32>, vector<128x64xf32> -> vector<128x128xf32>
    %c0_8 = arith.constant 0 : index
    %c0_9 = arith.constant 0 : index
    %c0_10 = arith.constant 0 : index
    %c0_11 = arith.constant 0 : index
    %17 = vector.load %arg6[%c0_8, %c0_9, %c0_10, %c0_11] : memref<1x2x128x128xf32, #tpu.memory_space<vmem>>, vector<1x1x128x128xf32>
    %18 = vector.shape_cast %17 : vector<1x1x128x128xf32> to vector<128x128xf32>
    %19 = vector.shape_cast %16 : vector<128x128xf32> to vector<1x1x128x128xf32>
    tpu.vector_store %arg6[%c0_8, %c0_9, %c0_10, %c0_11], %19 {strides = array<i32>} : memref<1x2x128x128xf32, #tpu.memory_space<vmem>>, vector<1x1x128x128xf32>,
    %20 = arith.mulf %8, %4 : vector<128x64xf32>
    %21 = arith.mulf %9, %5 : vector<128x64xf32>
    %22 = arith.subf %20, %21 : vector<128x64xf32>
    %23 = arith.mulf %8, %5 : vector<128x64xf32>
    %24 = arith.mulf %9, %4 : vector<128x64xf32>
    %25 = arith.addf %23, %24 : vector<128x64xf32>
    %26 = tpu.concatenate %22, %25 in 1 : vector<128x64xf32>, vector<128x64xf32> -> vector<128x128xf32>
    %c0_12 = arith.constant 0 : index
    %c0_13 = arith.constant 0 : index
    %c0_14 = arith.constant 0 : index
    %c0_15 = arith.constant 0 : index
    %27 = vector.load %arg7[%c0_12, %c0_13, %c0_14, %c0_15] : memref<1x2x128x128xf32, #tpu.memory_space<vmem>>, vector<1x1x128x128xf32>
    %28 = vector.shape_cast %27 : vector<1x1x128x128xf32> to vector<128x128xf32>
    %29 = vector.shape_cast %26 : vector<128x128xf32> to vector<1x1x128x128xf32>
    tpu.vector_store %arg7[%c0_12, %c0_13, %c0_14, %c0_15], %29 {strides = array<i32>} : memref<1x2x128x128xf32, #tpu.memory_space<vmem>>, vector<1x1x128x128xf32>,
    %30 = vector.extract_strided_slice %3 {offsets = [0, 512], sizes = [128, 128], strides = [1, 1]} : vector<128x768xf32> to vector<128x128xf32>
    %c0_16 = arith.constant 0 : index
    %c0_17 = arith.constant 0 : index
    %c0_18 = arith.constant 0 : index
    %c0_19 = arith.constant 0 : index
    %31 = vector.load %arg8[%c0_16, %c0_17, %c0_18, %c0_19] : memref<1x2x128x128xf32, #tpu.memory_space<vmem>>, vector<1x1x128x128xf32>
    %32 = vector.shape_cast %31 : vector<1x1x128x128xf32> to vector<128x128xf32>
    %33 = vector.shape_cast %30 : vector<128x128xf32> to vector<1x1x128x128xf32>
    tpu.vector_store %arg8[%c0_16, %c0_17, %c0_18, %c0_19], %33 {strides = array<i32>} : memref<1x2x128x128xf32, #tpu.memory_space<vmem>>, vector<1x1x128x128xf32>,
    %34 = vector.extract_strided_slice %3 {offsets = [0, 128], sizes = [128, 64], strides = [1, 1]} : vector<128x768xf32> to vector<128x64xf32>
    %35 = vector.extract_strided_slice %3 {offsets = [0, 192], sizes = [128, 64], strides = [1, 1]} : vector<128x768xf32> to vector<128x64xf32>
    %36 = vector.extract_strided_slice %3 {offsets = [0, 384], sizes = [128, 64], strides = [1, 1]} : vector<128x768xf32> to vector<128x64xf32>
    %37 = vector.extract_strided_slice %3 {offsets = [0, 448], sizes = [128, 64], strides = [1, 1]} : vector<128x768xf32> to vector<128x64xf32>
    %38 = arith.mulf %34, %4 : vector<128x64xf32>
    %39 = arith.mulf %35, %5 : vector<128x64xf32>
    %40 = arith.subf %38, %39 : vector<128x64xf32>
    %41 = arith.mulf %34, %5 : vector<128x64xf32>
    %42 = arith.mulf %35, %4 : vector<128x64xf32>
    %43 = arith.addf %41, %42 : vector<128x64xf32>
    %44 = tpu.concatenate %40, %43 in 1 : vector<128x64xf32>, vector<128x64xf32> -> vector<128x128xf32>
    %c0_20 = arith.constant 0 : index
    %c1 = arith.constant 1 : index
    %c0_21 = arith.constant 0 : index
    %c0_22 = arith.constant 0 : index
    %45 = vector.load %arg6[%c0_20, %c1, %c0_21, %c0_22] : memref<1x2x128x128xf32, #tpu.memory_space<vmem>>, vector<1x1x128x128xf32>
    %46 = vector.shape_cast %45 : vector<1x1x128x128xf32> to vector<128x128xf32>
    %47 = vector.shape_cast %44 : vector<128x128xf32> to vector<1x1x128x128xf32>
    tpu.vector_store %arg6[%c0_20, %c1, %c0_21, %c0_22], %47 {strides = array<i32>} : memref<1x2x128x128xf32, #tpu.memory_space<vmem>>, vector<1x1x128x128xf32>,
    %48 = arith.mulf %36, %4 : vector<128x64xf32>
    %49 = arith.mulf %37, %5 : vector<128x64xf32>
    %50 = arith.subf %48, %49 : vector<128x64xf32>
    %51 = arith.mulf %36, %5 : vector<128x64xf32>
    %52 = arith.mulf %37, %4 : vector<128x64xf32>
    %53 = arith.addf %51, %52 : vector<128x64xf32>
    %54 = tpu.concatenate %50, %53 in 1 : vector<128x64xf32>, vector<128x64xf32> -> vector<128x128xf32>
    %c0_23 = arith.constant 0 : index
    %c1_24 = arith.constant 1 : index
    %c0_25 = arith.constant 0 : index
    %c0_26 = arith.constant 0 : index
    %55 = vector.load %arg7[%c0_23, %c1_24, %c0_25, %c0_26] : memref<1x2x128x128xf32, #tpu.memory_space<vmem>>, vector<1x1x128x128xf32>
    %56 = vector.shape_cast %55 : vector<1x1x128x128xf32> to vector<128x128xf32>
    %57 = vector.shape_cast %54 : vector<128x128xf32> to vector<1x1x128x128xf32>
    tpu.vector_store %arg7[%c0_23, %c1_24, %c0_25, %c0_26], %57 {strides = array<i32>} : memref<1x2x128x128xf32, #tpu.memory_space<vmem>>, vector<1x1x128x128xf32>,
    %58 = vector.extract_strided_slice %3 {offsets = [0, 640], sizes = [128, 128], strides = [1, 1]} : vector<128x768xf32> to vector<128x128xf32>
    %c0_27 = arith.constant 0 : index
    %c1_28 = arith.constant 1 : index
    %c0_29 = arith.constant 0 : index
    %c0_30 = arith.constant 0 : index
    %59 = vector.load %arg8[%c0_27, %c1_28, %c0_29, %c0_30] : memref<1x2x128x128xf32, #tpu.memory_space<vmem>>, vector<1x1x128x128xf32>
    %60 = vector.shape_cast %59 : vector<1x1x128x128xf32> to vector<128x128xf32>
    %61 = vector.shape_cast %58 : vector<128x128xf32> to vector<1x1x128x128xf32>
    tpu.vector_store %arg8[%c0_27, %c1_28, %c0_29, %c0_30], %61 {strides = array<i32>} : memref<1x2x128x128xf32, #tpu.memory_space<vmem>>, vector<1x1x128x128xf32>,
    return
  }
  func.func @transform_0(%arg0: i32, %arg1: i32) -> (i32, i32, i32) {
    %c0_i32 = arith.constant 0 : i32
    %c0_i32_0 = arith.constant 0 : i32
    return %arg0, %arg1, %c0_i32 : i32, i32, i32
  }
  func.func @transform_1(%arg0: i32, %arg1: i32) -> (i32, i32) {
    %c0_i32 = arith.constant 0 : i32
    %c0_i32_0 = arith.constant 0 : i32
    %c0_i32_1 = arith.constant 0 : i32
    return %c0_i32, %c0_i32_0 : i32, i32
  }
  func.func @transform_2(%arg0: i32, %arg1: i32) -> (i32, i32) {
    %c0_i32 = arith.constant 0 : i32
    %c0_i32_0 = arith.constant 0 : i32
    return %arg1, %c0_i32 : i32, i32
  }
  func.func @transform_3(%arg0: i32, %arg1: i32) -> (i32, i32) {
    %c0_i32 = arith.constant 0 : i32
    %c0_i32_0 = arith.constant 0 : i32
    return %arg1, %c0_i32 : i32, i32
  }
  func.func @transform_4(%arg0: i32, %arg1: i32) -> (i32, i32, i32, i32) {
    %c0_i32 = arith.constant 0 : i32
    %c0_i32_0 = arith.constant 0 : i32
    %c0_i32_1 = arith.constant 0 : i32
    return %arg0, %c0_i32, %arg1, %c0_i32_0 : i32, i32, i32, i32
  }
  func.func @transform_5(%arg0: i32, %arg1: i32) -> (i32, i32, i32, i32) {
    %c0_i32 = arith.constant 0 : i32
    %c0_i32_0 = arith.constant 0 : i32
    %c0_i32_1 = arith.constant 0 : i32
    return %arg0, %c0_i32, %arg1, %c0_i32_0 : i32, i32, i32, i32
  }
  func.func @transform_6(%arg0: i32, %arg1: i32) -> (i32, i32, i32, i32) {
    %c0_i32 = arith.constant 0 : i32
    %c0_i32_0 = arith.constant 0 : i32
    %c0_i32_1 = arith.constant 0 : i32
    return %arg0, %c0_i32, %arg1, %c0_i32_0 : i32, i32, i32, i32
  }
}

</mosaic_0001>

<llo_original>
// kernel: tpu_custom_call.1
$region0: #{tpu_custom_call.1}
  #allocation0 [shape = 'u32[]', space=smem, size = 0x4, offset = 0x4, fixed_abs, tag = 'smem constant byte address 0x4 - core index']
  #allocation1 [shape = 'u32[72,128]{1,0:T(1,128)}', space=vmem, size = 0x9000, scoped, tag = 'internal scratch']
  #allocation11 [shape = 's32[]', space=sflag, size = 0x4, offset = 0, fixed_abs, tag = 'sflag constant byte address 0x0 - dummy sync flag']
  #allocation13 [shape = 's32[]', space=sflag, size = 0x4, offset = 0, fixed_abs, tag = 'sflag constant byte address 0x0 - dummy sync flag']
  #allocation15 [shape = 's32[]', space=sflag, size = 0x4, offset = 0, fixed_abs, tag = 'sflag constant byte address 0x0 - dummy sync flag']
  %s0 = inlined_call_operand.hbm [shape: f32[2,256,256], index: 0, kind: input, shape index: {}]
  %s1 = inlined_call_operand.hbm [shape: f32[256,768], index: 1, kind: input, shape index: {}]
  %s2 = inlined_call_operand.vmem [shape: f32[256,64], index: 2, kind: input, shape index: {}]
  %s3 = inlined_call_operand.vmem [shape: f32[256,64], index: 3, kind: input, shape index: {}]
  %s4 = inlined_call_operand.hbm [shape: f32[2,2,256,128], index: 4, kind: output, shape index: {0}]
  %s5 = inlined_call_operand.hbm [shape: f32[2,2,256,128], index: 5, kind: output, shape index: {1}]
  %s6 = inlined_call_operand.hbm [shape: f32[2,2,256,128], index: 6, kind: output, shape index: {2}]
  %7 = xla_tuple %s4, %s5, %s6
  %s8 = sld [smem:[#allocation0]]
  $region73: #{tpu_custom_call.1} parent=0
    _
  %s10 = ssub.s32 1, %s8
  %s11 = scalar_select 0, %s10, %s8
  $region1: #{tpu_custom_call.1} parent=0
    #allocation2 [shape = 'u8[262144]{0}', space=vmem, size = 0x40000, scoped, tag = 'input window, operand 0']
    #allocation3 [shape = 's32[2]{0}', space=sflag, size = 0x8, scoped, tag = 'scoped memory for tpu_custom_call.1']
    #allocation4 [shape = 's32[2]{0}', space=sflag, size = 0x8, scoped, tag = 'scoped memory for tpu_custom_call.1']
    #allocation5 [shape = 'u8[786432]{0}', space=vmem, size = 0xc0000, scoped, tag = 'input window, operand 1, single buffered']
    #allocation6 [shape = 's32[1]{0}', space=sflag, size = 0x4, scoped, tag = 'scoped memory for tpu_custom_call.1']
    #allocation7 [shape = 'u8[262144]{0}', space=vmem, size = 0x40000, scoped, tag = 'output window, operand 0']
    #allocation8 [shape = 'u8[262144]{0}', space=vmem, size = 0x40000, scoped, tag = 'output window, operand 1']
    #allocation9 [shape = 's32[2]{0}', space=sflag, size = 0x8, scoped, tag = 'scoped memory for tpu_custom_call.1']
    #allocation10 [shape = 'u8[262144]{0}', space=vmem, size = 0x40000, scoped, tag = 'output window, operand 2']
    %12 = vsyncpa [#allocation3], 0
    %s13 = scalar_lea.sflag [#allocation3], 1
    %14 = vsyncpa %s13, 0
    %15 = vsyncpa [#allocation6], 0
    %16 = vsyncpa [#allocation4], 0
    %s17 = scalar_lea.sflag [#allocation4], 1
    %18 = vsyncpa %s17, 0
    %19 = vsyncpa [#allocation9], 0
    %s20 = scalar_lea.sflag [#allocation9], 1
    %21 = vsyncpa %s20, 0
    loop: start=0, step=1, limit=6
    $region2: #{tpu_custom_call.1} parent=1 // loop_pre_header
      _
    $region3: #{tpu_custom_call.1} parent=1 // loop_header
      %s23 = sphi 0, %s27
      %p24 = scmp.ge.s32.totalorder %s23, 6
      %s30 = sphi 0, %s42
      %s31 = sphi 0, %s38
      %s32 = sphi 0, %s30
      %s33 = sphi 0, %s31
      %s34 = sphi 0, %s32
      %s35 = sphi 0, %s33
      %s47 = sphi 0, %s49
      %s50 = sphi 0, %s47
      %s51 = sphi 0, %s50
      %s67 = sphi 0, %s51
      %s71 = sphi 0, %s71
      %s73 = sphi 0, %s71
      %s74 = sphi 0, %s73
      %s88 = sphi 0, %s74
      %s94 = sphi 0, %s96
      %s97 = sphi 0, %s94
      %s98 = sphi 0, %s97
      %s114 = sphi 0, %s98
      %s120 = sphi 0, %s122
      %s123 = sphi 0, %s120
      %s124 = sphi 0, %s123
      %s140 = sphi 0, %s124
      %s148 = sphi 0, %s150
      %s151 = sphi 0, %s148
      %s152 = sphi 0, %s151
      %s168 = sphi 0, %s152
      %s176 = sphi 0, %s178
      %s179 = sphi 0, %s176
      %s180 = sphi 0, %s179
      %s196 = sphi 0, %s180
      %s204 = sphi 0, %s206
      %s207 = sphi 0, %s204
      %s208 = sphi 0, %s207
      %s224 = sphi 0, %s208
    $region4: #{tpu_custom_call.1} parent=1 // loop_header_branch
      %26 = sbr.rel (%p24) target = $region8
    $region5: #{tpu_custom_call.1} parent=1 // loop_body
      %s28 = ssub.s32 %s23, 1
      %s29 = ssub.s32 %s23, 2
      %s36 = sadd.s32 1, %s31
      %p37 = scmp.ge.s32.totalorder %s36, 2
      %s38 = scalar_select %p37, 0, %s36
      %s39 = sadd.s32 1, %s30
      %s40 = scalar_select %p37, %s39, %s30
      %p41 = scmp.ge.s32.totalorder %s40, 2
      %s42 = scalar_select %p41, 0, %s40
      %s43 = ssub.s32 %s30, %s42
      %s44 = ssub.s32 %s31, %s38
      %s45 = sor.u32 %s43, %s44
      %p46 = scmp.eq.s32.totalorder %s45, 0
      %s48 = sadd.s32 %s47, 1
      %s49 = scalar_select %p46, %s47, %s48
      %p52 = pneg %p46
      %p53 = scmp.eq.s32.totalorder %s23, 3
      %p54 = por %p52, %p53
      %p55 = scmp.ne.s32.totalorder %s47, %s50
      %p56 = scmp.eq.s32.totalorder %s23, 0
      %p57 = por %p55, %p56
      %p58 = scmp.ne.s32.totalorder %s47, %s50
      %p59 = scmp.eq.s32.totalorder %s28, 3
      %p60 = por %p58, %p59
      %p61 = scmp.ne.s32.totalorder %s50, %s51
      %p62 = scmp.eq.s32.totalorder %s28, 0
      %p63 = por %p61, %p62
      %p64 = scmp.ne.s32.totalorder %s50, %s51
      %p65 = scmp.eq.s32.totalorder %s29, 3
      %p66 = por %p64, %p65
      %p68 = scmp.ne.s32.totalorder %s51, %s67
      %p69 = scmp.eq.s32.totalorder %s29, 0
      %p70 = por %p68, %p69
      %s72 = sadd.s32 %s71, 1
      %p75 = scmp.eq.s32.totalorder %s23, 3
      %p76 = scmp.ne.s32.totalorder %s71, %s73
      %p77 = scmp.eq.s32.totalorder %s23, 0
      %p78 = por %p76, %p77
      %p79 = scmp.ne.s32.totalorder %s71, %s73
      %p80 = scmp.eq.s32.totalorder %s28, 3
      %p81 = por %p79, %p80
      %p82 = scmp.ne.s32.totalorder %s73, %s74
      %p83 = scmp.eq.s32.totalorder %s28, 0
      %p84 = por %p82, %p83
      %p85 = scmp.ne.s32.totalorder %s73, %s74
      %p86 = scmp.eq.s32.totalorder %s29, 3
      %p87 = por %p85, %p86
      %p89 = scmp.ne.s32.totalorder %s74, %s88
      %p90 = scmp.eq.s32.totalorder %s29, 0
      %p91 = por %p89, %p90
      %s92 = ssub.s32 %s31, %s38
      %p93 = scmp.eq.s32.totalorder %s92, 0
      %s95 = sadd.s32 %s94, 1
      %s96 = scalar_select %p93, %s94, %s95
      %p99 = pneg %p93
      %p100 = scmp.eq.s32.totalorder %s23, 3
      %p101 = por %p99, %p100
      %p102 = scmp.ne.s32.totalorder %s94, %s97
      %p103 = scmp.eq.s32.totalorder %s23, 0
      %p104 = por %p102, %p103
      %p105 = scmp.ne.s32.totalorder %s94, %s97
      %p106 = scmp.eq.s32.totalorder %s28, 3
      %p107 = por %p105, %p106
      %p108 = scmp.ne.s32.totalorder %s97, %s98
      %p109 = scmp.eq.s32.totalorder %s28, 0
      %p110 = por %p108, %p109
      %p111 = scmp.ne.s32.totalorder %s97, %s98
      %p112 = scmp.eq.s32.totalorder %s29, 3
      %p113 = por %p111, %p112
      %p115 = scmp.ne.s32.totalorder %s98, %s114
      %p116 = scmp.eq.s32.totalorder %s29, 0
      %p117 = por %p115, %p116
      %s118 = ssub.s32 %s31, %s38
      %p119 = scmp.eq.s32.totalorder %s118, 0
      %s121 = sadd.s32 %s120, 1
      %s122 = scalar_select %p119, %s120, %s121
      %p125 = pneg %p119
      %p126 = scmp.eq.s32.totalorder %s23, 3
      %p127 = por %p125, %p126
      %p128 = scmp.ne.s32.totalorder %s120, %s123
      %p129 = scmp.eq.s32.totalorder %s23, 0
      %p130 = por %p128, %p129
      %p131 = scmp.ne.s32.totalorder %s120, %s123
      %p132 = scmp.eq.s32.totalorder %s28, 3
      %p133 = por %p131, %p132
      %p134 = scmp.ne.s32.totalorder %s123, %s124
      %p135 = scmp.eq.s32.totalorder %s28, 0
      %p136 = por %p134, %p135
      %p137 = scmp.ne.s32.totalorder %s123, %s124
      %p138 = scmp.eq.s32.totalorder %s29, 3
      %p139 = por %p137, %p138
      %p141 = scmp.ne.s32.totalorder %s124, %s140
      %p142 = scmp.eq.s32.totalorder %s29, 0
      %p143 = por %p141, %p142
      %s144 = ssub.s32 %s30, %s42
      %s145 = ssub.s32 %s31, %s38
      %s146 = sor.u32 %s144, %s145
      %p147 = scmp.eq.s32.totalorder %s146, 0
      %s149 = sadd.s32 %s148, 1
      %s150 = scalar_select %p147, %s148, %s149
      %p153 = pneg %p147
      %p154 = scmp.eq.s32.totalorder %s23, 3
      %p155 = por %p153, %p154
      %p156 = scmp.ne.s32.totalorder %s148, %s151
      %p157 = scmp.eq.s32.totalorder %s23, 0
      %p158 = por %p156, %p157
      %p159 = scmp.ne.s32.totalorder %s148, %s151
      %p160 = scmp.eq.s32.totalorder %s28, 3
      %p161 = por %p159, %p160
      %p162 = scmp.ne.s32.totalorder %s151, %s152
      %p163 = scmp.eq.s32.totalorder %s28, 0
      %p164 = por %p162, %p163
      %p165 = scmp.ne.s32.totalorder %s151, %s152
      %p166 = scmp.eq.s32.totalorder %s29, 3
      %p167 = por %p165, %p166
      %p169 = scmp.ne.s32.totalorder %s152, %s168
      %p170 = scmp.eq.s32.totalorder %s29, 0
      %p171 = por %p169, %p170
      %s172 = ssub.s32 %s30, %s42
      %s173 = ssub.s32 %s31, %s38
      %s174 = sor.u32 %s172, %s173
      %p175 = scmp.eq.s32.totalorder %s174, 0
      %s177 = sadd.s32 %s176, 1
      %s178 = scalar_select %p175, %s176, %s177
      %p181 = pneg %p175
      %p182 = scmp.eq.s32.totalorder %s23, 3
      %p183 = por %p181, %p182
      %p184 = scmp.ne.s32.totalorder %s176, %s179
      %p185 = scmp.eq.s32.totalorder %s23, 0
      %p186 = por %p184, %p185
      %p187 = scmp.ne.s32.totalorder %s176, %s179
      %p188 = scmp.eq.s32.totalorder %s28, 3
      %p189 = por %p187, %p188
      %p190 = scmp.ne.s32.totalorder %s179, %s180
      %p191 = scmp.eq.s32.totalorder %s28, 0
      %p192 = por %p190, %p191
      %p193 = scmp.ne.s32.totalorder %s179, %s180
      %p194 = scmp.eq.s32.totalorder %s29, 3
      %p195 = por %p193, %p194
      %p197 = scmp.ne.s32.totalorder %s180, %s196
      %p198 = scmp.eq.s32.totalorder %s29, 0
      %p199 = por %p197, %p198
      %s200 = ssub.s32 %s30, %s42
      %s201 = ssub.s32 %s31, %s38
      %s202 = sor.u32 %s200, %s201
      %p203 = scmp.eq.s32.totalorder %s202, 0
      %s205 = sadd.s32 %s204, 1
      %s206 = scalar_select %p203, %s204, %s205
      %p209 = pneg %p203
      %p210 = scmp.eq.s32.totalorder %s23, 3
      %p211 = por %p209, %p210
      %p212 = scmp.ne.s32.totalorder %s204, %s207
      %p213 = scmp.eq.s32.totalorder %s23, 0
      %p214 = por %p212, %p213
      %p215 = scmp.ne.s32.totalorder %s204, %s207
      %p216 = scmp.eq.s32.totalorder %s28, 3
      %p217 = por %p215, %p216
      %p218 = scmp.ne.s32.totalorder %s207, %s208
      %p219 = scmp.eq.s32.totalorder %s28, 0
      %p220 = por %p218, %p219
      %p221 = scmp.ne.s32.totalorder %s207, %s208
      %p222 = scmp.eq.s32.totalorder %s29, 3
      %p223 = por %p221, %p222
      %p225 = scmp.ne.s32.totalorder %s208, %s224
      %p226 = scmp.eq.s32.totalorder %s29, 0
      %p227 = por %p225, %p226
      %p228 = scmp.le.s32.totalorder 1, %s23
      %p229 = scmp.lt.s32.totalorder %s23, 5
      %p230 = pnand %p228, %p229
      %p231 = pneg %p230
      // Predicated region
      $region9: #{tpu_custom_call.1} parent=5 // pred_check
        _
      $region10: #{tpu_custom_call.1} parent=5 // pred_check_branch
        %233 = sbr.rel (%p230) target = $region12
      $region11: #{tpu_custom_call.1} parent=5 // pred_region
        %s234 = ssub.s32 %s23, 1
        // Predicated region
        $region13: #{tpu_custom_call.1} parent=11 // pred_check
          %p235 = pneg %p84
        $region14: #{tpu_custom_call.1} parent=11 // pred_check_branch
          %237 = sbr.rel (%p235) target = $region16
        $region15: #{tpu_custom_call.1} parent=11 // pred_region
          %239 = vsyncadd [#allocation6], 0
          %s240 = sshll.u32 %s1, 4
          %s241 = int_to_ptr.hbm [resolvable:$true] %s240
          %s242 = sshll.u32 [#allocation5], 4
          %s243 = int_to_ptr.vmem [resolvable:$true] %s242
          %248 = dma.hbm_to_vmem [thread:$0]  %s241, 24576, %s243, [#allocation6], 768, 768, 48
        $region16: #{tpu_custom_call.1} parent=11 // pred_fallthru
          _
      $region12: #{tpu_custom_call.1} parent=5 // pred_fallthru
        _
      %p249 = scmp.lt.s32.totalorder %s23, 4
      // Predicated region
      $region17: #{tpu_custom_call.1} parent=5 // pred_check
        %p250 = pneg %p249
      $region18: #{tpu_custom_call.1} parent=5 // pred_check_branch
        %252 = sbr.rel (%p250) target = $region20
      $region19: #{tpu_custom_call.1} parent=5 // pred_region
        // Predicated region
        $region21: #{tpu_custom_call.1} parent=19 // pred_check
          %p253 = pneg %p57
        $region22: #{tpu_custom_call.1} parent=19 // pred_check_branch
          %255 = sbr.rel (%p253) target = $region24
        $region23: #{tpu_custom_call.1} parent=19 // pred_region
          %s256 = sand.u32 %s47, 1
          %s257 = scalar_lea.sflag [#allocation3], %s256
          %s258 = sand.u32 %s47, 1
          %s259 = smul.addr %s258, 256
          %s260 = scalar_lea.vmem [#allocation2], %s259
          %s261 = smul.u32 16, %s31
          %263 = vsyncadd %s257, 0
          %s264 = smul.addr %s261, 2
          %s265 = smul.addr %s30, 64
          %s266 = sadd.s32 %s264, %s265
          %s267 = smul.addr %s266, 8
          %s268 = scalar_lea.hbm %s0, %s267
          %s269 = sshll.u32 %s268, 4
          %s270 = int_to_ptr.hbm [resolvable:$true] %s269
          %s271 = sshll.u32 %s260, 4
          %s272 = int_to_ptr.vmem [resolvable:$true] %s271
          %277 = dma.hbm_to_vmem [thread:$0]  %s270, 4096, %s272, %s257, 256, 256, 16
        $region24: #{tpu_custom_call.1} parent=19 // pred_fallthru
          _
        // Predicated region
        $region25: #{tpu_custom_call.1} parent=19 // pred_check
          %p278 = pneg %p104
        $region26: #{tpu_custom_call.1} parent=19 // pred_check_branch
          %280 = sbr.rel (%p278) target = $region28
        $region27: #{tpu_custom_call.1} parent=19 // pred_region
          %s281 = smul.u32 16, %s31
          %p282 = scmp.lt.s32.totalorder %s281, 31
          %s283 = scalar_select %p282, %s281, 31
          %s284 = smul.addr %s283, 8
          %s285 = scalar_lea.vmem %s2, %s284
          %s286 = smul.u32 16, %s31
        $region28: #{tpu_custom_call.1} parent=19 // pred_fallthru
          _
        // Predicated region
        $region29: #{tpu_custom_call.1} parent=19 // pred_check
          %p287 = pneg %p130
        $region30: #{tpu_custom_call.1} parent=19 // pred_check_branch
          %289 = sbr.rel (%p287) target = $region32
        $region31: #{tpu_custom_call.1} parent=19 // pred_region
          %s290 = smul.u32 16, %s31
          %p291 = scmp.lt.s32.totalorder %s290, 31
          %s292 = scalar_select %p291, %s290, 31
          %s293 = smul.addr %s292, 8
          %s294 = scalar_lea.vmem %s3, %s293
          %s295 = smul.u32 16, %s31
        $region32: #{tpu_custom_call.1} parent=19 // pred_fallthru
          _
      $region20: #{tpu_custom_call.1} parent=5 // pred_fallthru
        _
      %p296 = scmp.le.s32.totalorder 1, %s23
      %p297 = scmp.lt.s32.totalorder %s23, 5
      %p298 = pnand %p296, %p297
      %p299 = pneg %p298
      // Predicated region
      $region33: #{tpu_custom_call.1} parent=5 // pred_check
        _
      $region34: #{tpu_custom_call.1} parent=5 // pred_check_branch
        %301 = sbr.rel (%p298) target = $region36
      $region35: #{tpu_custom_call.1} parent=5 // pred_region
        %s302 = ssub.s32 %s23, 1
        %s303 = sand.u32 %s50, 1
        %s304 = scalar_lea.sflag [#allocation3], %s303
        %s305 = sand.u32 %s50, 1
        %s306 = smul.addr %s305, 256
        %s307 = scalar_lea.vmem [#allocation2], %s306
        // Predicated region
        $region37: #{tpu_custom_call.1} parent=35 // pred_check
          %p308 = pneg %p63
        $region38: #{tpu_custom_call.1} parent=35 // pred_check_branch
          %310 = sbr.rel (%p308) target = $region40
        $region39: #{tpu_custom_call.1} parent=35 // pred_region
          %312 = dma.done %s304, 4096
        $region40: #{tpu_custom_call.1} parent=35 // pred_fallthru
          _
        // Predicated region
        $region41: #{tpu_custom_call.1} parent=35 // pred_check
          %p313 = pneg %p84
        $region42: #{tpu_custom_call.1} parent=35 // pred_check_branch
          %315 = sbr.rel (%p313) target = $region44
        $region43: #{tpu_custom_call.1} parent=35 // pred_region
          %317 = dma.done [#allocation6], 24576
        $region44: #{tpu_custom_call.1} parent=35 // pred_fallthru
          _
        %s318 = sand.u32 %s50, 1
        %s319 = scalar_lea.sflag [#allocation3], %s318
        %s320 = sand.u32 %s50, 1
        %s321 = smul.addr %s320, 256
        %s322 = scalar_lea.vmem [#allocation2], %s321
        %p323 = pneg %p63
        %p324 = pneg %p60
        %p325 = pneg %p84
        %p326 = pneg %p81
        %s327 = smul.u32 16, %s33
        %p328 = scmp.lt.s32.totalorder %s327, 31
        %s329 = scalar_select %p328, %s327, 31
        %s330 = smul.addr %s329, 8
        %s331 = scalar_lea.vmem %s2, %s330
        %p332 = pneg %p110
        %p333 = pneg %p107
        %s334 = smul.u32 16, %s33
        %p335 = scmp.lt.s32.totalorder %s334, 31
        %s336 = scalar_select %p335, %s334, 31
        %s337 = smul.addr %s336, 8
        %s338 = scalar_lea.vmem %s3, %s337
        %p339 = pneg %p136
        %p340 = pneg %p133
        %p341 = pneg %p164
        %p342 = pneg %p161
        %s343 = sand.u32 %s151, 1
        %s344 = scalar_lea.sflag [#allocation4], %s343
        %s345 = sand.u32 %s151, 1
        %s346 = smul.addr %s345, 256
        %s347 = scalar_lea.vmem [#allocation7], %s346
        %p348 = pneg %p192
        %p349 = pneg %p189
        %s350 = sand.u32 %s28, 1
        %s351 = scalar_lea.sflag [#allocation9], %s350
        %s352 = sand.u32 %s179, 1
        %s353 = smul.addr %s352, 256
        %s354 = scalar_lea.vmem [#allocation8], %s353
        %p355 = pneg %p220
        %p356 = pneg %p217
        %s357 = sand.u32 %s28, 1
        %s358 = scalar_lea.sflag [#allocation9], %s357
        %s359 = sand.u32 %s207, 1
        %s360 = smul.addr %s359, 256
        %s361 = scalar_lea.vmem [#allocation10], %s360
        %s362 = smul.u32 16, %s33
        %s363 = smul.u32 16, %s33
        %p364 = scmp.lt.s32.totalorder %s363, 31
        %s365 = scalar_select %p364, %s363, 31
        %s366 = smul.addr %s365, 8
        %s367 = scalar_lea.vmem %s2, %s366
        %s368 = smul.u32 16, %s33
        %s369 = smul.u32 16, %s33
        %p370 = scmp.lt.s32.totalorder %s369, 31
        %s371 = scalar_select %p370, %s369, 31
        %s372 = smul.addr %s371, 8
        %s373 = scalar_lea.vmem %s3, %s372
        %s374 = smul.u32 16, %s33
        %s375 = smul.u32 16, %s33
        %s376 = smul.u32 16, %s33
        %s377 = smul.u32 16, %s33
        %v378 = vld [vmem:[%s307] sm:$0xff]
        %v379 = vld [vmem:[%s307 + $0x8] sm:$0xff]
        %v380 = vld [vmem:[%s307 + $0x10] sm:$0xff]
        %v381 = vld [vmem:[%s307 + $0x18] sm:$0xff]
        %v382 = vld [vmem:[%s307 + $0x20] sm:$0xff]
        %v383 = vld [vmem:[%s307 + $0x28] sm:$0xff]
        %v384 = vld [vmem:[%s307 + $0x30] sm:$0xff]
        %v385 = vld [vmem:[%s307 + $0x38] sm:$0xff]
        %v386 = vld [vmem:[%s307 + $0x40] sm:$0xff]
        %v387 = vld [vmem:[%s307 + $0x48] sm:$0xff]
        %v388 = vld [vmem:[%s307 + $0x50] sm:$0xff]
        %v389 = vld [vmem:[%s307 + $0x58] sm:$0xff]
        %v390 = vld [vmem:[%s307 + $0x60] sm:$0xff]
        %v391 = vld [vmem:[%s307 + $0x68] sm:$0xff]
        %v392 = vld [vmem:[%s307 + $0x70] sm:$0xff]
        %v393 = vld [vmem:[%s307 + $0x78] sm:$0xff]
        %v394 = vld [vmem:[%s307 + $0x80] sm:$0xff]
        %v395 = vld [vmem:[%s307 + $0x88] sm:$0xff]
        %v396 = vld [vmem:[%s307 + $0x90] sm:$0xff]
        %v397 = vld [vmem:[%s307 + $0x98] sm:$0xff]
        %v398 = vld [vmem:[%s307 + $0xa0] sm:$0xff]
        %v399 = vld [vmem:[%s307 + $0xa8] sm:$0xff]
        %v400 = vld [vmem:[%s307 + $0xb0] sm:$0xff]
        %v401 = vld [vmem:[%s307 + $0xb8] sm:$0xff]
        %v402 = vld [vmem:[%s307 + $0xc0] sm:$0xff]
        %v403 = vld [vmem:[%s307 + $0xc8] sm:$0xff]
        %v404 = vld [vmem:[%s307 + $0xd0] sm:$0xff]
        %v405 = vld [vmem:[%s307 + $0xd8] sm:$0xff]
        %v406 = vld [vmem:[%s307 + $0xe0] sm:$0xff]
        %v407 = vld [vmem:[%s307 + $0xe8] sm:$0xff]
        %v408 = vld [vmem:[%s307 + $0xf0] sm:$0xff]
        %v409 = vld [vmem:[%s307 + $0xf8] sm:$0xff]
        %v410 = vld [vmem:[#allocation5] sm:$0xff]
        %v411 = vld [vmem:[#allocation5 + $0x8] sm:$0xff]
        %v412 = vld [vmem:[#allocation5 + $0x10] sm:$0xff]
        %v413 = vld [vmem:[#allocation5 + $0x18] sm:$0xff]
        %v414 = vld [vmem:[#allocation5 + $0x20] sm:$0xff]
        %v415 = vld [vmem:[#allocation5 + $0x28] sm:$0xff]
        %v416 = vld [vmem:[#allocation5 + $0x30] sm:$0xff]
        %v417 = vld [vmem:[#allocation5 + $0x38] sm:$0xff]
        %v418 = vld [vmem:[#allocation5 + $0x40] sm:$0xff]
        %v419 = vld [vmem:[#allocation5 + $0x48] sm:$0xff]
        %v420 = vld [vmem:[#allocation5 + $0x50] sm:$0xff]
        %v421 = vld [vmem:[#allocation5 + $0x58] sm:$0xff]
        %v422 = vld [vmem:[#allocation5 + $0x60] sm:$0xff]
        %v423 = vld [vmem:[#allocation5 + $0x68] sm:$0xff]
        %v424 = vld [vmem:[#allocation5 + $0x70] sm:$0xff]
        %v425 = vld [vmem:[#allocation5 + $0x78] sm:$0xff]
        %v426 = vld [vmem:[#allocation5 + $0x80] sm:$0xff]
        %v427 = vld [vmem:[#allocation5 + $0x88] sm:$0xff]
        %v428 = vld [vmem:[#allocation5 + $0x90] sm:$0xff]
        %v429 = vld [vmem:[#allocation5 + $0x98] sm:$0xff]
        %v430 = vld [vmem:[#allocation5 + $0xa0] sm:$0xff]
        %v431 = vld [vmem:[#allocation5 + $0xa8] sm:$0xff]
        %v432 = vld [vmem:[#allocation5 + $0xb0] sm:$0xff]
        %v433 = vld [vmem:[#allocation5 + $0xb8] sm:$0xff]
        %v434 = vld [vmem:[#allocation5 + $0xc0] sm:$0xff]
        %v435 = vld [vmem:[#allocation5 + $0xc8] sm:$0xff]
        %v436 = vld [vmem:[#allocation5 + $0xd0] sm:$0xff]
        %v437 = vld [vmem:[#allocation5 + $0xd8] sm:$0xff]
        %v438 = vld [vmem:[#allocation5 + $0xe0] sm:$0xff]
        %v439 = vld [vmem:[#allocation5 + $0xe8] sm:$0xff]
        %v440 = vld [vmem:[#allocation5 + $0xf0] sm:$0xff]
        %v441 = vld [vmem:[#allocation5 + $0xf8] sm:$0xff]
        %v442 = vld [vmem:[#allocation5 + $0x100] sm:$0xff]
        %v443 = vld [vmem:[#allocation5 + $0x108] sm:$0xff]
        %v444 = vld [vmem:[#allocation5 + $0x110] sm:$0xff]
        %v445 = vld [vmem:[#allocation5 + $0x118] sm:$0xff]
        %v446 = vld [vmem:[#allocation5 + $0x120] sm:$0xff]
        %v447 = vld [vmem:[#allocation5 + $0x128] sm:$0xff]
        %v448 = vld [vmem:[#allocation5 + $0x130] sm:$0xff]
        %v449 = vld [vmem:[#allocation5 + $0x138] sm:$0xff]
        %v450 = vld [vmem:[#allocation5 + $0x140] sm:$0xff]
        %v451 = vld [vmem:[#allocation5 + $0x148] sm:$0xff]
        %v452 = vld [vmem:[#allocation5 + $0x150] sm:$0xff]
        %v453 = vld [vmem:[#allocation5 + $0x158] sm:$0xff]
        %v454 = vld [vmem:[#allocation5 + $0x160] sm:$0xff]
        %v455 = vld [vmem:[#allocation5 + $0x168] sm:$0xff]
        %v456 = vld [vmem:[#allocation5 + $0x170] sm:$0xff]
        %v457 = vld [vmem:[#allocation5 + $0x178] sm:$0xff]
        %v458 = vld [vmem:[#allocation5 + $0x180] sm:$0xff]
        %v459 = vld [vmem:[#allocation5 + $0x188] sm:$0xff]
        %v460 = vld [vmem:[#allocation5 + $0x190] sm:$0xff]
        %v461 = vld [vmem:[#allocation5 + $0x198] sm:$0xff]
        %v462 = vld [vmem:[#allocation5 + $0x1a0] sm:$0xff]
        %v463 = vld [vmem:[#allocation5 + $0x1a8] sm:$0xff]
        %v464 = vld [vmem:[#allocation5 + $0x1b0] sm:$0xff]
        %v465 = vld [vmem:[#allocation5 + $0x1b8] sm:$0xff]
        %v466 = vld [vmem:[#allocation5 + $0x1c0] sm:$0xff]
        %v467 = vld [vmem:[#allocation5 + $0x1c8] sm:$0xff]
        %v468 = vld [vmem:[#allocation5 + $0x1d0] sm:$0xff]
        %v469 = vld [vmem:[#allocation5 + $0x1d8] sm:$0xff]
        %v470 = vld [vmem:[#allocation5 + $0x1e0] sm:$0xff]
        %v471 = vld [vmem:[#allocation5 + $0x1e8] sm:$0xff]
        %v472 = vld [vmem:[#allocation5 + $0x1f0] sm:$0xff]
        %v473 = vld [vmem:[#allocation5 + $0x1f8] sm:$0xff]
        %v474 = vld [vmem:[#allocation5 + $0x200] sm:$0xff]
        %v475 = vld [vmem:[#allocation5 + $0x208] sm:$0xff]
        %v476 = vld [vmem:[#allocation5 + $0x210] sm:$0xff]
        %v477 = vld [vmem:[#allocation5 + $0x218] sm:$0xff]
        %v478 = vld [vmem:[#allocation5 + $0x220] sm:$0xff]
        %v479 = vld [vmem:[#allocation5 + $0x228] sm:$0xff]
        %v480 = vld [vmem:[#allocation5 + $0x230] sm:$0xff]
        %v481 = vld [vmem:[#allocation5 + $0x238] sm:$0xff]
        %v482 = vld [vmem:[#allocation5 + $0x240] sm:$0xff]
        %v483 = vld [vmem:[#allocation5 + $0x248] sm:$0xff]
        %v484 = vld [vmem:[#allocation5 + $0x250] sm:$0xff]
        %v485 = vld [vmem:[#allocation5 + $0x258] sm:$0xff]
        %v486 = vld [vmem:[#allocation5 + $0x260] sm:$0xff]
        %v487 = vld [vmem:[#allocation5 + $0x268] sm:$0xff]
        %v488 = vld [vmem:[#allocation5 + $0x270] sm:$0xff]
        %v489 = vld [vmem:[#allocation5 + $0x278] sm:$0xff]
        %v490 = vld [vmem:[#allocation5 + $0x280] sm:$0xff]
        %v491 = vld [vmem:[#allocation5 + $0x288] sm:$0xff]
        %v492 = vld [vmem:[#allocation5 + $0x290] sm:$0xff]
        %v493 = vld [vmem:[#allocation5 + $0x298] sm:$0xff]
        %v494 = vld [vmem:[#allocation5 + $0x2a0] sm:$0xff]
        %v495 = vld [vmem:[#allocation5 + $0x2a8] sm:$0xff]
        %v496 = vld [vmem:[#allocation5 + $0x2b0] sm:$0xff]
        %v497 = vld [vmem:[#allocation5 + $0x2b8] sm:$0xff]
        %v498 = vld [vmem:[#allocation5 + $0x2c0] sm:$0xff]
        %v499 = vld [vmem:[#allocation5 + $0x2c8] sm:$0xff]
        %v500 = vld [vmem:[#allocation5 + $0x2d0] sm:$0xff]
        %v501 = vld [vmem:[#allocation5 + $0x2d8] sm:$0xff]
        %v502 = vld [vmem:[#allocation5 + $0x2e0] sm:$0xff]
        %v503 = vld [vmem:[#allocation5 + $0x2e8] sm:$0xff]
        %v504 = vld [vmem:[#allocation5 + $0x2f0] sm:$0xff]
        %v505 = vld [vmem:[#allocation5 + $0x2f8] sm:$0xff]
        %v506 = vld [vmem:[#allocation5 + $0x300] sm:$0xff]
        %v507 = vld [vmem:[#allocation5 + $0x308] sm:$0xff]
        %v508 = vld [vmem:[#allocation5 + $0x310] sm:$0xff]
        %v509 = vld [vmem:[#allocation5 + $0x318] sm:$0xff]
        %v510 = vld [vmem:[#allocation5 + $0x320] sm:$0xff]
        %v511 = vld [vmem:[#allocation5 + $0x328] sm:$0xff]
        %v512 = vld [vmem:[#allocation5 + $0x330] sm:$0xff]
        %v513 = vld [vmem:[#allocation5 + $0x338] sm:$0xff]
        %v514 = vld [vmem:[#allocation5 + $0x340] sm:$0xff]
        %v515 = vld [vmem:[#allocation5 + $0x348] sm:$0xff]
        %v516 = vld [vmem:[#allocation5 + $0x350] sm:$0xff]
        %v517 = vld [vmem:[#allocation5 + $0x358] sm:$0xff]
        %v518 = vld [vmem:[#allocation5 + $0x360] sm:$0xff]
        %v519 = vld [vmem:[#allocation5 + $0x368] sm:$0xff]
        %v520 = vld [vmem:[#allocation5 + $0x370] sm:$0xff]
        %v521 = vld [vmem:[#allocation5 + $0x378] sm:$0xff]
        %v522 = vld [vmem:[#allocation5 + $0x380] sm:$0xff]
        %v523 = vld [vmem:[#allocation5 + $0x388] sm:$0xff]
        %v524 = vld [vmem:[#allocation5 + $0x390] sm:$0xff]
        %v525 = vld [vmem:[#allocation5 + $0x398] sm:$0xff]
        %v526 = vld [vmem:[#allocation5 + $0x3a0] sm:$0xff]
        %v527 = vld [vmem:[#allocation5 + $0x3a8] sm:$0xff]
        %v528 = vld [vmem:[#allocation5 + $0x3b0] sm:$0xff]
        %v529 = vld [vmem:[#allocation5 + $0x3b8] sm:$0xff]
        %v530 = vld [vmem:[#allocation5 + $0x3c0] sm:$0xff]
        %v531 = vld [vmem:[#allocation5 + $0x3c8] sm:$0xff]
        %v532 = vld [vmem:[#allocation5 + $0x3d0] sm:$0xff]
        %v533 = vld [vmem:[#allocation5 + $0x3d8] sm:$0xff]
        %v534 = vld [vmem:[#allocation5 + $0x3e0] sm:$0xff]
        %v535 = vld [vmem:[#allocation5 + $0x3e8] sm:$0xff]
        %v536 = vld [vmem:[#allocation5 + $0x3f0] sm:$0xff]
        %v537 = vld [vmem:[#allocation5 + $0x3f8] sm:$0xff]
        %v538 = vld [vmem:[#allocation5 + $0x400] sm:$0xff]
        %v539 = vld [vmem:[#allocation5 + $0x408] sm:$0xff]
        %v540 = vld [vmem:[#allocation5 + $0x410] sm:$0xff]
        %v541 = vld [vmem:[#allocation5 + $0x418] sm:$0xff]
        %v542 = vld [vmem:[#allocation5 + $0x420] sm:$0xff]
        %v543 = vld [vmem:[#allocation5 + $0x428] sm:$0xff]
        %v544 = vld [vmem:[#allocation5 + $0x430] sm:$0xff]
        %v545 = vld [vmem:[#allocation5 + $0x438] sm:$0xff]
        %v546 = vld [vmem:[#allocation5 + $0x440] sm:$0xff]
        %v547 = vld [vmem:[#allocation5 + $0x448] sm:$0xff]
        %v548 = vld [vmem:[#allocation5 + $0x450] sm:$0xff]
        %v549 = vld [vmem:[#allocation5 + $0x458] sm:$0xff]
        %v550 = vld [vmem:[#allocation5 + $0x460] sm:$0xff]
        %v551 = vld [vmem:[#allocation5 + $0x468] sm:$0xff]
        %v552 = vld [vmem:[#allocation5 + $0x470] sm:$0xff]
        %v553 = vld [vmem:[#allocation5 + $0x478] sm:$0xff]
        %v554 = vld [vmem:[#allocation5 + $0x480] sm:$0xff]
        %v555 = vld [vmem:[#allocation5 + $0x488] sm:$0xff]
        %v556 = vld [vmem:[#allocation5 + $0x490] sm:$0xff]
        %v557 = vld [vmem:[#allocation5 + $0x498] sm:$0xff]
        %v558 = vld [vmem:[#allocation5 + $0x4a0] sm:$0xff]
        %v559 = vld [vmem:[#allocation5 + $0x4a8] sm:$0xff]
        %v560 = vld [vmem:[#allocation5 + $0x4b0] sm:$0xff]
        %v561 = vld [vmem:[#allocation5 + $0x4b8] sm:$0xff]
        %v562 = vld [vmem:[#allocation5 + $0x4c0] sm:$0xff]
        %v563 = vld [vmem:[#allocation5 + $0x4c8] sm:$0xff]
        %v564 = vld [vmem:[#allocation5 + $0x4d0] sm:$0xff]
        %v565 = vld [vmem:[#allocation5 + $0x4d8] sm:$0xff]
        %v566 = vld [vmem:[#allocation5 + $0x4e0] sm:$0xff]
        %v567 = vld [vmem:[#allocation5 + $0x4e8] sm:$0xff]
        %v568 = vld [vmem:[#allocation5 + $0x4f0] sm:$0xff]
        %v569 = vld [vmem:[#allocation5 + $0x4f8] sm:$0xff]
        %v570 = vld [vmem:[#allocation5 + $0x500] sm:$0xff]
        %v571 = vld [vmem:[#allocation5 + $0x508] sm:$0xff]
        %v572 = vld [vmem:[#allocation5 + $0x510] sm:$0xff]
        %v573 = vld [vmem:[#allocation5 + $0x518] sm:$0xff]
        %v574 = vld [vmem:[#allocation5 + $0x520] sm:$0xff]
        %v575 = vld [vmem:[#allocation5 + $0x528] sm:$0xff]
        %v576 = vld [vmem:[#allocation5 + $0x530] sm:$0xff]
        %v577 = vld [vmem:[#allocation5 + $0x538] sm:$0xff]
        %v578 = vld [vmem:[#allocation5 + $0x540] sm:$0xff]
        %v579 = vld [vmem:[#allocation5 + $0x548] sm:$0xff]
        %v580 = vld [vmem:[#allocation5 + $0x550] sm:$0xff]
        %v581 = vld [vmem:[#allocation5 + $0x558] sm:$0xff]
        %v582 = vld [vmem:[#allocation5 + $0x560] sm:$0xff]
        %v583 = vld [vmem:[#allocation5 + $0x568] sm:$0xff]
        %v584 = vld [vmem:[#allocation5 + $0x570] sm:$0xff]
        %v585 = vld [vmem:[#allocation5 + $0x578] sm:$0xff]
        %v586 = vld [vmem:[#allocation5 + $0x580] sm:$0xff]
        %v587 = vld [vmem:[#allocation5 + $0x588] sm:$0xff]
        %v588 = vld [vmem:[#allocation5 + $0x590] sm:$0xff]
        %v589 = vld [vmem:[#allocation5 + $0x598] sm:$0xff]
        %v590 = vld [vmem:[#allocation5 + $0x5a0] sm:$0xff]
        %v591 = vld [vmem:[#allocation5 + $0x5a8] sm:$0xff]
        %v592 = vld [vmem:[#allocation5 + $0x5b0] sm:$0xff]
        %v593 = vld [vmem:[#allocation5 + $0x5b8] sm:$0xff]
        %v594 = vld [vmem:[#allocation5 + $0x5c0] sm:$0xff]
        %v595 = vld [vmem:[#allocation5 + $0x5c8] sm:$0xff]
        %v596 = vld [vmem:[#allocation5 + $0x5d0] sm:$0xff]
        %v597 = vld [vmem:[#allocation5 + $0x5d8] sm:$0xff]
        %v598 = vld [vmem:[#allocation5 + $0x5e0] sm:$0xff]
        %v599 = vld [vmem:[#allocation5 + $0x5e8] sm:$0xff]
        %v600 = vld [vmem:[#allocation5 + $0x5f0] sm:$0xff]
        %v601 = vld [vmem:[#allocation5 + $0x5f8] sm:$0xff]
        %602 = vmatpush.msra.mxu0 %v500
        %603 = vmatpush.msra.mxu0 %v494
        %604 = vmatpush.msra.mxu0 %v488
        %605 = vmatpush.msra.mxu0 %v482
        %606 = vmatpush.msra.mxu0 %v476
        %607 = vmatpush.msra.mxu0 %v470
        %608 = vmatpush.msra.mxu0 %v464
        %609 = vmatpush.msra.mxu0 %v458
        %610 = vmatpush.msra.mxu0 %v452
        %611 = vmatpush.msra.mxu0 %v446
        %612 = vmatpush.msra.mxu0 %v440
        %613 = vmatpush.msra.mxu0 %v434
        %614 = vmatpush.msra.mxu0 %v428
        %615 = vmatpush.msra.mxu0 %v422
        %616 = vmatpush.msra.mxu0 %v416
        %617 = vmatpush.msra.mxu0 %v410
        %618 = vmatmul.f32.gmra.mxu0 %v378
        %v619 = vpop.f32.mrf.mxu0
        %v620 = vadd.f32 0.0, %v619
        %621 = vmatmul.f32.gmra.mxu0 %v380
        %v622 = vpop.f32.mrf.mxu0
        %v623 = vadd.f32 0.0, %v622
        %624 = vmatmul.f32.gmra.mxu0 %v382
        %v625 = vpop.f32.mrf.mxu0
        %v626 = vadd.f32 0.0, %v625
        %627 = vmatmul.f32.gmra.mxu0 %v384
        %v628 = vpop.f32.mrf.mxu0
        %v629 = vadd.f32 0.0, %v628
        %630 = vmatmul.f32.gmra.mxu0 %v386
        %v631 = vpop.f32.mrf.mxu0
        %v632 = vadd.f32 0.0, %v631
        %633 = vmatmul.f32.gmra.mxu0 %v388
        %v634 = vpop.f32.mrf.mxu0
        %v635 = vadd.f32 0.0, %v634
        %636 = vmatmul.f32.gmra.mxu0 %v390
        %v637 = vpop.f32.mrf.mxu0
        %v638 = vadd.f32 0.0, %v637
        %639 = vmatmul.f32.gmra.mxu0 %v392
        %v640 = vpop.f32.mrf.mxu0
        %v641 = vadd.f32 0.0, %v640
        %642 = vmatmul.f32.gmra.mxu0 %v394
        %v643 = vpop.f32.mrf.mxu0
        %v644 = vadd.f32 0.0, %v643
        %645 = vmatmul.f32.gmra.mxu0 %v396
        %v646 = vpop.f32.mrf.mxu0
        %v647 = vadd.f32 0.0, %v646
        %648 = vmatmul.f32.gmra.mxu0 %v398
        %v649 = vpop.f32.mrf.mxu0
        %v650 = vadd.f32 0.0, %v649
        %651 = vmatmul.f32.gmra.mxu0 %v400
        %v652 = vpop.f32.mrf.mxu0
        %v653 = vadd.f32 0.0, %v652
        %654 = vmatmul.f32.gmra.mxu0 %v402
        %v655 = vpop.f32.mrf.mxu0
        %v656 = vadd.f32 0.0, %v655
        %657 = vmatmul.f32.gmra.mxu0 %v404
        %v658 = vpop.f32.mrf.mxu0
        %v659 = vadd.f32 0.0, %v658
        %660 = vmatmul.f32.gmra.mxu0 %v406
        %v661 = vpop.f32.mrf.mxu0
        %v662 = vadd.f32 0.0, %v661
        %663 = vmatmul.f32.gmra.mxu0 %v408
        %v664 = vpop.f32.mrf.mxu0
        %v665 = vadd.f32 0.0, %v664
        %666 = vdwg.mxu0
        %667 = vmatpush.msra.mxu0 %v596
        %668 = vmatpush.msra.mxu0 %v590
        %669 = vmatpush.msra.mxu0 %v584
        %670 = vmatpush.msra.mxu0 %v578
        %671 = vmatpush.msra.mxu0 %v572
        %672 = vmatpush.msra.mxu0 %v566
        %673 = vmatpush.msra.mxu0 %v560
        %674 = vmatpush.msra.mxu0 %v554
        %675 = vmatpush.msra.mxu0 %v548
        %676 = vmatpush.msra.mxu0 %v542
        %677 = vmatpush.msra.mxu0 %v536
        %678 = vmatpush.msra.mxu0 %v530
        %679 = vmatpush.msra.mxu0 %v524
        %680 = vmatpush.msra.mxu0 %v518
        %681 = vmatpush.msra.mxu0 %v512
        %682 = vmatpush.msra.mxu0 %v506
        %683 = vmatmul.f32.gmra.mxu0 %v379
        %v684 = vpop.f32.mrf.mxu0
        %v685 = vadd.f32 %v620, %v684
        %686 = vmatmul.f32.gmra.mxu0 %v381
        %v687 = vpop.f32.mrf.mxu0
        %v688 = vadd.f32 %v623, %v687
        %689 = vmatmul.f32.gmra.mxu0 %v383
        %v690 = vpop.f32.mrf.mxu0
        %v691 = vadd.f32 %v626, %v690
        %692 = vmatmul.f32.gmra.mxu0 %v385
        %v693 = vpop.f32.mrf.mxu0
        %v694 = vadd.f32 %v629, %v693
        %695 = vmatmul.f32.gmra.mxu0 %v387
        %v696 = vpop.f32.mrf.mxu0
        %v697 = vadd.f32 %v632, %v696
        %698 = vmatmul.f32.gmra.mxu0 %v389
        %v699 = vpop.f32.mrf.mxu0
        %v700 = vadd.f32 %v635, %v699
        %701 = vmatmul.f32.gmra.mxu0 %v391
        %v702 = vpop.f32.mrf.mxu0
        %v703 = vadd.f32 %v638, %v702
        %704 = vmatmul.f32.gmra.mxu0 %v393
        %v705 = vpop.f32.mrf.mxu0
        %v706 = vadd.f32 %v641, %v705
        %707 = vmatmul.f32.gmra.mxu0 %v395
        %v708 = vpop.f32.mrf.mxu0
        %v709 = vadd.f32 %v644, %v708
        %710 = vmatmul.f32.gmra.mxu0 %v397
        %v711 = vpop.f32.mrf.mxu0
        %v712 = vadd.f32 %v647, %v711
        %713 = vmatmul.f32.gmra.mxu0 %v399
        %v714 = vpop.f32.mrf.mxu0
        %v715 = vadd.f32 %v650, %v714
        %716 = vmatmul.f32.gmra.mxu0 %v401
        %v717 = vpop.f32.mrf.mxu0
        %v718 = vadd.f32 %v653, %v717
        %719 = vmatmul.f32.gmra.mxu0 %v403
        %v720 = vpop.f32.mrf.mxu0
        %v721 = vadd.f32 %v656, %v720
        %722 = vmatmul.f32.gmra.mxu0 %v405
        %v723 = vpop.f32.mrf.mxu0
        %v724 = vadd.f32 %v659, %v723
        %725 = vmatmul.f32.gmra.mxu0 %v407
        %v726 = vpop.f32.mrf.mxu0
        %v727 = vadd.f32 %v662, %v726
        %728 = vmatmul.f32.gmra.mxu0 %v409
        %v729 = vpop.f32.mrf.mxu0
        %v730 = vadd.f32 %v665, %v729
        %731 = vdwg.mxu0
        %732 = vmatpush.msra.mxu0 %v501
        %733 = vmatpush.msra.mxu0 %v495
        %734 = vmatpush.msra.mxu0 %v489
        %735 = vmatpush.msra.mxu0 %v483
        %736 = vmatpush.msra.mxu0 %v477
        %737 = vmatpush.msra.mxu0 %v471
        %738 = vmatpush.msra.mxu0 %v465
        %739 = vmatpush.msra.mxu0 %v459
        %740 = vmatpush.msra.mxu0 %v453
        %741 = vmatpush.msra.mxu0 %v447
        %742 = vmatpush.msra.mxu0 %v441
        %743 = vmatpush.msra.mxu0 %v435
        %744 = vmatpush.msra.mxu0 %v429
        %745 = vmatpush.msra.mxu0 %v423
        %746 = vmatpush.msra.mxu0 %v417
        %747 = vmatpush.msra.mxu0 %v411
        %748 = vmatmul.f32.gmra.mxu0 %v378
        %v749 = vpop.f32.mrf.mxu0
        %v750 = vadd.f32 0.0, %v749
        %751 = vmatmul.f32.gmra.mxu0 %v380
        %v752 = vpop.f32.mrf.mxu0
        %v753 = vadd.f32 0.0, %v752
        %754 = vmatmul.f32.gmra.mxu0 %v382
        %v755 = vpop.f32.mrf.mxu0
        %v756 = vadd.f32 0.0, %v755
        %757 = vmatmul.f32.gmra.mxu0 %v384
        %v758 = vpop.f32.mrf.mxu0
        %v759 = vadd.f32 0.0, %v758
        %760 = vmatmul.f32.gmra.mxu0 %v386
        %v761 = vpop.f32.mrf.mxu0
        %v762 = vadd.f32 0.0, %v761
        %763 = vmatmul.f32.gmra.mxu0 %v388
        %v764 = vpop.f32.mrf.mxu0
        %v765 = vadd.f32 0.0, %v764
        %766 = vmatmul.f32.gmra.mxu0 %v390
        %v767 = vpop.f32.mrf.mxu0
        %v768 = vadd.f32 0.0, %v767
        %769 = vmatmul.f32.gmra.mxu0 %v392
        %v770 = vpop.f32.mrf.mxu0
        %v771 = vadd.f32 0.0, %v770
        %772 = vmatmul.f32.gmra.mxu0 %v394
        %v773 = vpop.f32.mrf.mxu0
        %v774 = vadd.f32 0.0, %v773
        %775 = vmatmul.f32.gmra.mxu0 %v396
        %v776 = vpop.f32.mrf.mxu0
        %v777 = vadd.f32 0.0, %v776
        %778 = vmatmul.f32.gmra.mxu0 %v398
        %v779 = vpop.f32.mrf.mxu0
        %v780 = vadd.f32 0.0, %v779
        %781 = vmatmul.f32.gmra.mxu0 %v400
        %v782 = vpop.f32.mrf.mxu0
        %v783 = vadd.f32 0.0, %v782
        %784 = vmatmul.f32.gmra.mxu0 %v402
        %v785 = vpop.f32.mrf.mxu0
        %v786 = vadd.f32 0.0, %v785
        %787 = vmatmul.f32.gmra.mxu0 %v404
        %v788 = vpop.f32.mrf.mxu0
        %v789 = vadd.f32 0.0, %v788
        %790 = vmatmul.f32.gmra.mxu0 %v406
        %v791 = vpop.f32.mrf.mxu0
        %v792 = vadd.f32 0.0, %v791
        %793 = vmatmul.f32.gmra.mxu0 %v408
        %v794 = vpop.f32.mrf.mxu0
        %v795 = vadd.f32 0.0, %v794
        %796 = vdwg.mxu0
        %797 = vmatpush.msra.mxu0 %v597
        %798 = vmatpush.msra.mxu0 %v591
        %799 = vmatpush.msra.mxu0 %v585
        %800 = vmatpush.msra.mxu0 %v579
        %801 = vmatpush.msra.mxu0 %v573
        %802 = vmatpush.msra.mxu0 %v567
        %803 = vmatpush.msra.mxu0 %v561
        %804 = vmatpush.msra.mxu0 %v555
        %805 = vmatpush.msra.mxu0 %v549
        %806 = vmatpush.msra.mxu0 %v543
        %807 = vmatpush.msra.mxu0 %v537
        %808 = vmatpush.msra.mxu0 %v531
        %809 = vmatpush.msra.mxu0 %v525
        %810 = vmatpush.msra.mxu0 %v519
        %811 = vmatpush.msra.mxu0 %v513
        %812 = vmatpush.msra.mxu0 %v507
        %813 = vmatmul.f32.gmra.mxu0 %v379
        %v814 = vpop.f32.mrf.mxu0
        %v815 = vadd.f32 %v750, %v814
        %816 = vmatmul.f32.gmra.mxu0 %v381
        %v817 = vpop.f32.mrf.mxu0
        %v818 = vadd.f32 %v753, %v817
        %819 = vmatmul.f32.gmra.mxu0 %v383
        %v820 = vpop.f32.mrf.mxu0
        %v821 = vadd.f32 %v756, %v820
        %822 = vmatmul.f32.gmra.mxu0 %v385
        %v823 = vpop.f32.mrf.mxu0
        %v824 = vadd.f32 %v759, %v823
        %825 = vmatmul.f32.gmra.mxu0 %v387
        %v826 = vpop.f32.mrf.mxu0
        %v827 = vadd.f32 %v762, %v826
        %828 = vmatmul.f32.gmra.mxu0 %v389
        %v829 = vpop.f32.mrf.mxu0
        %v830 = vadd.f32 %v765, %v829
        %831 = vmatmul.f32.gmra.mxu0 %v391
        %v832 = vpop.f32.mrf.mxu0
        %v833 = vadd.f32 %v768, %v832
        %834 = vmatmul.f32.gmra.mxu0 %v393
        %v835 = vpop.f32.mrf.mxu0
        %v836 = vadd.f32 %v771, %v835
        %837 = vmatmul.f32.gmra.mxu0 %v395
        %v838 = vpop.f32.mrf.mxu0
        %v839 = vadd.f32 %v774, %v838
        %840 = vmatmul.f32.gmra.mxu0 %v397
        %v841 = vpop.f32.mrf.mxu0
        %v842 = vadd.f32 %v777, %v841
        %843 = vmatmul.f32.gmra.mxu0 %v399
        %v844 = vpop.f32.mrf.mxu0
        %v845 = vadd.f32 %v780, %v844
        %846 = vmatmul.f32.gmra.mxu0 %v401
        %v847 = vpop.f32.mrf.mxu0
        %v848 = vadd.f32 %v783, %v847
        %849 = vmatmul.f32.gmra.mxu0 %v403
        %v850 = vpop.f32.mrf.mxu0
        %v851 = vadd.f32 %v786, %v850
        %852 = vmatmul.f32.gmra.mxu0 %v405
        %v853 = vpop.f32.mrf.mxu0
        %v854 = vadd.f32 %v789, %v853
        %855 = vmatmul.f32.gmra.mxu0 %v407
        %v856 = vpop.f32.mrf.mxu0
        %v857 = vadd.f32 %v792, %v856
        %858 = vmatmul.f32.gmra.mxu0 %v409
        %v859 = vpop.f32.mrf.mxu0
        %v860 = vadd.f32 %v795, %v859
        %861 = vdwg.mxu0
        %862 = vmatpush.msra.mxu0 %v502
        %863 = vmatpush.msra.mxu0 %v496
        %864 = vmatpush.msra.mxu0 %v490
        %865 = vmatpush.msra.mxu0 %v484
        %866 = vmatpush.msra.mxu0 %v478
        %867 = vmatpush.msra.mxu0 %v472
        %868 = vmatpush.msra.mxu0 %v466
        %869 = vmatpush.msra.mxu0 %v460
        %870 = vmatpush.msra.mxu0 %v454
        %871 = vmatpush.msra.mxu0 %v448
        %872 = vmatpush.msra.mxu0 %v442
        %873 = vmatpush.msra.mxu0 %v436
        %874 = vmatpush.msra.mxu0 %v430
        %875 = vmatpush.msra.mxu0 %v424
        %876 = vmatpush.msra.mxu0 %v418
        %877 = vmatpush.msra.mxu0 %v412
        %878 = vmatmul.f32.gmra.mxu0 %v378
        %v879 = vpop.f32.mrf.mxu0
        %v880 = vadd.f32 0.0, %v879
        %881 = vmatmul.f32.gmra.mxu0 %v380
        %v882 = vpop.f32.mrf.mxu0
        %v883 = vadd.f32 0.0, %v882
        %884 = vmatmul.f32.gmra.mxu0 %v382
        %v885 = vpop.f32.mrf.mxu0
        %v886 = vadd.f32 0.0, %v885
        %887 = vmatmul.f32.gmra.mxu0 %v384
        %v888 = vpop.f32.mrf.mxu0
        %v889 = vadd.f32 0.0, %v888
        %890 = vmatmul.f32.gmra.mxu0 %v386
        %v891 = vpop.f32.mrf.mxu0
        %v892 = vadd.f32 0.0, %v891
        %893 = vmatmul.f32.gmra.mxu0 %v388
        %v894 = vpop.f32.mrf.mxu0
        %v895 = vadd.f32 0.0, %v894
        %896 = vmatmul.f32.gmra.mxu0 %v390
        %v897 = vpop.f32.mrf.mxu0
        %v898 = vadd.f32 0.0, %v897
        %899 = vmatmul.f32.gmra.mxu0 %v392
        %v900 = vpop.f32.mrf.mxu0
        %v901 = vadd.f32 0.0, %v900
        %902 = vmatmul.f32.gmra.mxu0 %v394
        %v903 = vpop.f32.mrf.mxu0
        %v904 = vadd.f32 0.0, %v903
        %905 = vmatmul.f32.gmra.mxu0 %v396
        %v906 = vpop.f32.mrf.mxu0
        %v907 = vadd.f32 0.0, %v906
        %908 = vmatmul.f32.gmra.mxu0 %v398
        %v909 = vpop.f32.mrf.mxu0
        %v910 = vadd.f32 0.0, %v909
        %911 = vmatmul.f32.gmra.mxu0 %v400
        %v912 = vpop.f32.mrf.mxu0
        %v913 = vadd.f32 0.0, %v912
        %914 = vmatmul.f32.gmra.mxu0 %v402
        %v915 = vpop.f32.mrf.mxu0
        %v916 = vadd.f32 0.0, %v915
        %917 = vmatmul.f32.gmra.mxu0 %v404
        %v918 = vpop.f32.mrf.mxu0
        %v919 = vadd.f32 0.0, %v918
        %920 = vmatmul.f32.gmra.mxu0 %v406
        %v921 = vpop.f32.mrf.mxu0
        %v922 = vadd.f32 0.0, %v921
        %923 = vmatmul.f32.gmra.mxu0 %v408
        %v924 = vpop.f32.mrf.mxu0
        %v925 = vadd.f32 0.0, %v924
        %926 = vdwg.mxu0
        %927 = vmatpush.msra.mxu0 %v598
        %928 = vmatpush.msra.mxu0 %v592
        %929 = vmatpush.msra.mxu0 %v586
        %930 = vmatpush.msra.mxu0 %v580
        %931 = vmatpush.msra.mxu0 %v574
        %932 = vmatpush.msra.mxu0 %v568
        %933 = vmatpush.msra.mxu0 %v562
        %934 = vmatpush.msra.mxu0 %v556
        %935 = vmatpush.msra.mxu0 %v550
        %936 = vmatpush.msra.mxu0 %v544
        %937 = vmatpush.msra.mxu0 %v538
        %938 = vmatpush.msra.mxu0 %v532
        %939 = vmatpush.msra.mxu0 %v526
        %940 = vmatpush.msra.mxu0 %v520
        %941 = vmatpush.msra.mxu0 %v514
        %942 = vmatpush.msra.mxu0 %v508
        %943 = vmatmul.f32.gmra.mxu0 %v379
        %v944 = vpop.f32.mrf.mxu0
        %v945 = vadd.f32 %v880, %v944
        %946 = vmatmul.f32.gmra.mxu0 %v381
        %v947 = vpop.f32.mrf.mxu0
        %v948 = vadd.f32 %v883, %v947
        %949 = vmatmul.f32.gmra.mxu0 %v383
        %v950 = vpop.f32.mrf.mxu0
        %v951 = vadd.f32 %v886, %v950
        %952 = vmatmul.f32.gmra.mxu0 %v385
        %v953 = vpop.f32.mrf.mxu0
        %v954 = vadd.f32 %v889, %v953
        %955 = vmatmul.f32.gmra.mxu0 %v387
        %v956 = vpop.f32.mrf.mxu0
        %v957 = vadd.f32 %v892, %v956
        %958 = vmatmul.f32.gmra.mxu0 %v389
        %v959 = vpop.f32.mrf.mxu0
        %v960 = vadd.f32 %v895, %v959
        %961 = vmatmul.f32.gmra.mxu0 %v391
        %v962 = vpop.f32.mrf.mxu0
        %v963 = vadd.f32 %v898, %v962
        %964 = vmatmul.f32.gmra.mxu0 %v393
        %v965 = vpop.f32.mrf.mxu0
        %v966 = vadd.f32 %v901, %v965
        %967 = vmatmul.f32.gmra.mxu0 %v395
        %v968 = vpop.f32.mrf.mxu0
        %v969 = vadd.f32 %v904, %v968
        %970 = vmatmul.f32.gmra.mxu0 %v397
        %v971 = vpop.f32.mrf.mxu0
        %v972 = vadd.f32 %v907, %v971
        %973 = vmatmul.f32.gmra.mxu0 %v399
        %v974 = vpop.f32.mrf.mxu0
        %v975 = vadd.f32 %v910, %v974
        %976 = vmatmul.f32.gmra.mxu0 %v401
        %v977 = vpop.f32.mrf.mxu0
        %v978 = vadd.f32 %v913, %v977
        %979 = vmatmul.f32.gmra.mxu0 %v403
        %v980 = vpop.f32.mrf.mxu0
        %v981 = vadd.f32 %v916, %v980
        %982 = vmatmul.f32.gmra.mxu0 %v405
        %v983 = vpop.f32.mrf.mxu0
        %v984 = vadd.f32 %v919, %v983
        %985 = vmatmul.f32.gmra.mxu0 %v407
        %v986 = vpop.f32.mrf.mxu0
        %v987 = vadd.f32 %v922, %v986
        %988 = vmatmul.f32.gmra.mxu0 %v409
        %v989 = vpop.f32.mrf.mxu0
        %v990 = vadd.f32 %v925, %v989
        %991 = vdwg.mxu0
        %992 = vmatpush.msra.mxu0 %v503
        %993 = vmatpush.msra.mxu0 %v497
        %994 = vmatpush.msra.mxu0 %v491
        %995 = vmatpush.msra.mxu0 %v485
        %996 = vmatpush.msra.mxu0 %v479
        %997 = vmatpush.msra.mxu0 %v473
        %998 = vmatpush.msra.mxu0 %v467
        %999 = vmatpush.msra.mxu0 %v461
        %1000 = vmatpush.msra.mxu0 %v455
        %1001 = vmatpush.msra.mxu0 %v449
        %1002 = vmatpush.msra.mxu0 %v443
        %1003 = vmatpush.msra.mxu0 %v437
        %1004 = vmatpush.msra.mxu0 %v431
        %1005 = vmatpush.msra.mxu0 %v425
        %1006 = vmatpush.msra.mxu0 %v419
        %1007 = vmatpush.msra.mxu0 %v413
        %1008 = vmatmul.f32.gmra.mxu0 %v378
        %v1009 = vpop.f32.mrf.mxu0
        %v1010 = vadd.f32 0.0, %v1009
        %1011 = vmatmul.f32.gmra.mxu0 %v380
        %v1012 = vpop.f32.mrf.mxu0
        %v1013 = vadd.f32 0.0, %v1012
        %1014 = vmatmul.f32.gmra.mxu0 %v382
        %v1015 = vpop.f32.mrf.mxu0
        %v1016 = vadd.f32 0.0, %v1015
        %1017 = vmatmul.f32.gmra.mxu0 %v384
        %v1018 = vpop.f32.mrf.mxu0
        %v1019 = vadd.f32 0.0, %v1018
        %1020 = vmatmul.f32.gmra.mxu0 %v386
        %v1021 = vpop.f32.mrf.mxu0
        %v1022 = vadd.f32 0.0, %v1021
        %1023 = vmatmul.f32.gmra.mxu0 %v388
        %v1024 = vpop.f32.mrf.mxu0
        %v1025 = vadd.f32 0.0, %v1024
        %1026 = vmatmul.f32.gmra.mxu0 %v390
        %v1027 = vpop.f32.mrf.mxu0
        %v1028 = vadd.f32 0.0, %v1027
        %1029 = vmatmul.f32.gmra.mxu0 %v392
        %v1030 = vpop.f32.mrf.mxu0
        %v1031 = vadd.f32 0.0, %v1030
        %1032 = vmatmul.f32.gmra.mxu0 %v394
        %v1033 = vpop.f32.mrf.mxu0
        %v1034 = vadd.f32 0.0, %v1033
        %1035 = vmatmul.f32.gmra.mxu0 %v396
        %v1036 = vpop.f32.mrf.mxu0
        %v1037 = vadd.f32 0.0, %v1036
        %1038 = vmatmul.f32.gmra.mxu0 %v398
        %v1039 = vpop.f32.mrf.mxu0
        %v1040 = vadd.f32 0.0, %v1039
        %1041 = vmatmul.f32.gmra.mxu0 %v400
        %v1042 = vpop.f32.mrf.mxu0
        %v1043 = vadd.f32 0.0, %v1042
        %1044 = vmatmul.f32.gmra.mxu0 %v402
        %v1045 = vpop.f32.mrf.mxu0
        %v1046 = vadd.f32 0.0, %v1045
        %1047 = vmatmul.f32.gmra.mxu0 %v404
        %v1048 = vpop.f32.mrf.mxu0
        %v1049 = vadd.f32 0.0, %v1048
        %1050 = vmatmul.f32.gmra.mxu0 %v406
        %v1051 = vpop.f32.mrf.mxu0
        %v1052 = vadd.f32 0.0, %v1051
        %1053 = vmatmul.f32.gmra.mxu0 %v408
        %v1054 = vpop.f32.mrf.mxu0
        %v1055 = vadd.f32 0.0, %v1054
        %1056 = vdwg.mxu0
        %1057 = vmatpush.msra.mxu0 %v599
        %1058 = vmatpush.msra.mxu0 %v593
        %1059 = vmatpush.msra.mxu0 %v587
        %1060 = vmatpush.msra.mxu0 %v581
        %1061 = vmatpush.msra.mxu0 %v575
        %1062 = vmatpush.msra.mxu0 %v569
        %1063 = vmatpush.msra.mxu0 %v563
        %1064 = vmatpush.msra.mxu0 %v557
        %1065 = vmatpush.msra.mxu0 %v551
        %1066 = vmatpush.msra.mxu0 %v545
        %1067 = vmatpush.msra.mxu0 %v539
        %1068 = vmatpush.msra.mxu0 %v533
        %1069 = vmatpush.msra.mxu0 %v527
        %1070 = vmatpush.msra.mxu0 %v521
        %1071 = vmatpush.msra.mxu0 %v515
        %1072 = vmatpush.msra.mxu0 %v509
        %1073 = vmatmul.f32.gmra.mxu0 %v379
        %v1074 = vpop.f32.mrf.mxu0
        %v1075 = vadd.f32 %v1010, %v1074
        %1076 = vmatmul.f32.gmra.mxu0 %v381
        %v1077 = vpop.f32.mrf.mxu0
        %v1078 = vadd.f32 %v1013, %v1077
        %1079 = vmatmul.f32.gmra.mxu0 %v383
        %v1080 = vpop.f32.mrf.mxu0
        %v1081 = vadd.f32 %v1016, %v1080
        %1082 = vmatmul.f32.gmra.mxu0 %v385
        %v1083 = vpop.f32.mrf.mxu0
        %v1084 = vadd.f32 %v1019, %v1083
        %1085 = vmatmul.f32.gmra.mxu0 %v387
        %v1086 = vpop.f32.mrf.mxu0
        %v1087 = vadd.f32 %v1022, %v1086
        %1088 = vmatmul.f32.gmra.mxu0 %v389
        %v1089 = vpop.f32.mrf.mxu0
        %v1090 = vadd.f32 %v1025, %v1089
        %1091 = vmatmul.f32.gmra.mxu0 %v391
        %v1092 = vpop.f32.mrf.mxu0
        %v1093 = vadd.f32 %v1028, %v1092
        %1094 = vmatmul.f32.gmra.mxu0 %v393
        %v1095 = vpop.f32.mrf.mxu0
        %v1096 = vadd.f32 %v1031, %v1095
        %1097 = vmatmul.f32.gmra.mxu0 %v395
        %v1098 = vpop.f32.mrf.mxu0
        %v1099 = vadd.f32 %v1034, %v1098
        %1100 = vmatmul.f32.gmra.mxu0 %v397
        %v1101 = vpop.f32.mrf.mxu0
        %v1102 = vadd.f32 %v1037, %v1101
        %1103 = vmatmul.f32.gmra.mxu0 %v399
        %v1104 = vpop.f32.mrf.mxu0
        %v1105 = vadd.f32 %v1040, %v1104
        %1106 = vmatmul.f32.gmra.mxu0 %v401
        %v1107 = vpop.f32.mrf.mxu0
        %v1108 = vadd.f32 %v1043, %v1107
        %1109 = vmatmul.f32.gmra.mxu0 %v403
        %v1110 = vpop.f32.mrf.mxu0
        %v1111 = vadd.f32 %v1046, %v1110
        %1112 = vmatmul.f32.gmra.mxu0 %v405
        %v1113 = vpop.f32.mrf.mxu0
        %v1114 = vadd.f32 %v1049, %v1113
        %1115 = vmatmul.f32.gmra.mxu0 %v407
        %v1116 = vpop.f32.mrf.mxu0
        %v1117 = vadd.f32 %v1052, %v1116
        %1118 = vmatmul.f32.gmra.mxu0 %v409
        %v1119 = vpop.f32.mrf.mxu0
        %v1120 = vadd.f32 %v1055, %v1119
        %1121 = vdwg.mxu0
        %1122 = vmatpush.msra.mxu0 %v504
        %1123 = vmatpush.msra.mxu0 %v498
        %1124 = vmatpush.msra.mxu0 %v492
        %1125 = vmatpush.msra.mxu0 %v486
        %1126 = vmatpush.msra.mxu0 %v480
        %1127 = vmatpush.msra.mxu0 %v474
        %1128 = vmatpush.msra.mxu0 %v468
        %1129 = vmatpush.msra.mxu0 %v462
        %1130 = vmatpush.msra.mxu0 %v456
        %1131 = vmatpush.msra.mxu0 %v450
        %1132 = vmatpush.msra.mxu0 %v444
        %1133 = vmatpush.msra.mxu0 %v438
        %1134 = vmatpush.msra.mxu0 %v432
        %1135 = vmatpush.msra.mxu0 %v426
        %1136 = vmatpush.msra.mxu0 %v420
        %1137 = vmatpush.msra.mxu0 %v414
        %1138 = vmatmul.f32.gmra.mxu0 %v378
        %v1139 = vpop.f32.mrf.mxu0
        %v1140 = vadd.f32 0.0, %v1139
        %1141 = vmatmul.f32.gmra.mxu0 %v380
        %v1142 = vpop.f32.mrf.mxu0
        %v1143 = vadd.f32 0.0, %v1142
        %1144 = vmatmul.f32.gmra.mxu0 %v382
        %v1145 = vpop.f32.mrf.mxu0
        %v1146 = vadd.f32 0.0, %v1145
        %1147 = vmatmul.f32.gmra.mxu0 %v384
        %v1148 = vpop.f32.mrf.mxu0
        %v1149 = vadd.f32 0.0, %v1148
        %1150 = vmatmul.f32.gmra.mxu0 %v386
        %v1151 = vpop.f32.mrf.mxu0
        %v1152 = vadd.f32 0.0, %v1151
        %1153 = vmatmul.f32.gmra.mxu0 %v388
        %v1154 = vpop.f32.mrf.mxu0
        %v1155 = vadd.f32 0.0, %v1154
        %1156 = vmatmul.f32.gmra.mxu0 %v390
        %v1157 = vpop.f32.mrf.mxu0
        %v1158 = vadd.f32 0.0, %v1157
        %1159 = vmatmul.f32.gmra.mxu0 %v392
        %v1160 = vpop.f32.mrf.mxu0
        %v1161 = vadd.f32 0.0, %v1160
        %1162 = vmatmul.f32.gmra.mxu0 %v394
        %v1163 = vpop.f32.mrf.mxu0
        %v1164 = vadd.f32 0.0, %v1163
        %1165 = vmatmul.f32.gmra.mxu0 %v396
        %v1166 = vpop.f32.mrf.mxu0
        %v1167 = vadd.f32 0.0, %v1166
        %1168 = vmatmul.f32.gmra.mxu0 %v398
        %v1169 = vpop.f32.mrf.mxu0
        %v1170 = vadd.f32 0.0, %v1169
        %1171 = vmatmul.f32.gmra.mxu0 %v400
        %v1172 = vpop.f32.mrf.mxu0
        %v1173 = vadd.f32 0.0, %v1172
        %1174 = vmatmul.f32.gmra.mxu0 %v402
        %v1175 = vpop.f32.mrf.mxu0
        %v1176 = vadd.f32 0.0, %v1175
        %1177 = vmatmul.f32.gmra.mxu0 %v404
        %v1178 = vpop.f32.mrf.mxu0
        %v1179 = vadd.f32 0.0, %v1178
        %1180 = vmatmul.f32.gmra.mxu0 %v406
        %v1181 = vpop.f32.mrf.mxu0
        %v1182 = vadd.f32 0.0, %v1181
        %1183 = vmatmul.f32.gmra.mxu0 %v408
        %v1184 = vpop.f32.mrf.mxu0
        %v1185 = vadd.f32 0.0, %v1184
        %1186 = vdwg.mxu0
        %1187 = vmatpush.msra.mxu0 %v600
        %1188 = vmatpush.msra.mxu0 %v594
        %1189 = vmatpush.msra.mxu0 %v588
        %1190 = vmatpush.msra.mxu0 %v582
        %1191 = vmatpush.msra.mxu0 %v576
        %1192 = vmatpush.msra.mxu0 %v570
        %1193 = vmatpush.msra.mxu0 %v564
        %1194 = vmatpush.msra.mxu0 %v558
        %1195 = vmatpush.msra.mxu0 %v552
        %1196 = vmatpush.msra.mxu0 %v546
        %1197 = vmatpush.msra.mxu0 %v540
        %1198 = vmatpush.msra.mxu0 %v534
        %1199 = vmatpush.msra.mxu0 %v528
        %1200 = vmatpush.msra.mxu0 %v522
        %1201 = vmatpush.msra.mxu0 %v516
        %1202 = vmatpush.msra.mxu0 %v510
        %1203 = vmatmul.f32.gmra.mxu0 %v379
        %v1204 = vpop.f32.mrf.mxu0
        %v1205 = vadd.f32 %v1140, %v1204
        %1206 = vmatmul.f32.gmra.mxu0 %v381
        %v1207 = vpop.f32.mrf.mxu0
        %v1208 = vadd.f32 %v1143, %v1207
        %1209 = vmatmul.f32.gmra.mxu0 %v383
        %v1210 = vpop.f32.mrf.mxu0
        %v1211 = vadd.f32 %v1146, %v1210
        %1212 = vmatmul.f32.gmra.mxu0 %v385
        %v1213 = vpop.f32.mrf.mxu0
        %v1214 = vadd.f32 %v1149, %v1213
        %1215 = vmatmul.f32.gmra.mxu0 %v387
        %v1216 = vpop.f32.mrf.mxu0
        %v1217 = vadd.f32 %v1152, %v1216
        %1218 = vmatmul.f32.gmra.mxu0 %v389
        %v1219 = vpop.f32.mrf.mxu0
        %v1220 = vadd.f32 %v1155, %v1219
        %1221 = vmatmul.f32.gmra.mxu0 %v391
        %v1222 = vpop.f32.mrf.mxu0
        %v1223 = vadd.f32 %v1158, %v1222
        %1224 = vmatmul.f32.gmra.mxu0 %v393
        %v1225 = vpop.f32.mrf.mxu0
        %v1226 = vadd.f32 %v1161, %v1225
        %1227 = vmatmul.f32.gmra.mxu0 %v395
        %v1228 = vpop.f32.mrf.mxu0
        %v1229 = vadd.f32 %v1164, %v1228
        %1230 = vmatmul.f32.gmra.mxu0 %v397
        %v1231 = vpop.f32.mrf.mxu0
        %v1232 = vadd.f32 %v1167, %v1231
        %1233 = vmatmul.f32.gmra.mxu0 %v399
        %v1234 = vpop.f32.mrf.mxu0
        %v1235 = vadd.f32 %v1170, %v1234
        %1236 = vmatmul.f32.gmra.mxu0 %v401
        %v1237 = vpop.f32.mrf.mxu0
        %v1238 = vadd.f32 %v1173, %v1237
        %1239 = vmatmul.f32.gmra.mxu0 %v403
        %v1240 = vpop.f32.mrf.mxu0
        %v1241 = vadd.f32 %v1176, %v1240
        %1242 = vmatmul.f32.gmra.mxu0 %v405
        %v1243 = vpop.f32.mrf.mxu0
        %v1244 = vadd.f32 %v1179, %v1243
        %1245 = vmatmul.f32.gmra.mxu0 %v407
        %v1246 = vpop.f32.mrf.mxu0
        %v1247 = vadd.f32 %v1182, %v1246
        %1248 = vmatmul.f32.gmra.mxu0 %v409
        %v1249 = vpop.f32.mrf.mxu0
        %v1250 = vadd.f32 %v1185, %v1249
        %1251 = vdwg.mxu0
        %1252 = vmatpush.msra.mxu0 %v505
        %1253 = vmatpush.msra.mxu0 %v499
        %1254 = vmatpush.msra.mxu0 %v493
        %1255 = vmatpush.msra.mxu0 %v487
        %1256 = vmatpush.msra.mxu0 %v481
        %1257 = vmatpush.msra.mxu0 %v475
        %1258 = vmatpush.msra.mxu0 %v469
        %1259 = vmatpush.msra.mxu0 %v463
        %1260 = vmatpush.msra.mxu0 %v457
        %1261 = vmatpush.msra.mxu0 %v451
        %1262 = vmatpush.msra.mxu0 %v445
        %1263 = vmatpush.msra.mxu0 %v439
        %1264 = vmatpush.msra.mxu0 %v433
        %1265 = vmatpush.msra.mxu0 %v427
        %1266 = vmatpush.msra.mxu0 %v421
        %1267 = vmatpush.msra.mxu0 %v415
        %1268 = vmatmul.f32.gmra.mxu0 %v378
        %v1269 = vpop.f32.mrf.mxu0
        %v1270 = vadd.f32 0.0, %v1269
        %1271 = vmatmul.f32.gmra.mxu0 %v380
        %v1272 = vpop.f32.mrf.mxu0
        %v1273 = vadd.f32 0.0, %v1272
        %1274 = vmatmul.f32.gmra.mxu0 %v382
        %v1275 = vpop.f32.mrf.mxu0
        %v1276 = vadd.f32 0.0, %v1275
        %1277 = vmatmul.f32.gmra.mxu0 %v384
        %v1278 = vpop.f32.mrf.mxu0
        %v1279 = vadd.f32 0.0, %v1278
        %1280 = vmatmul.f32.gmra.mxu0 %v386
        %v1281 = vpop.f32.mrf.mxu0
        %v1282 = vadd.f32 0.0, %v1281
        %1283 = vmatmul.f32.gmra.mxu0 %v388
        %v1284 = vpop.f32.mrf.mxu0
        %v1285 = vadd.f32 0.0, %v1284
        %1286 = vmatmul.f32.gmra.mxu0 %v390
        %v1287 = vpop.f32.mrf.mxu0
        %v1288 = vadd.f32 0.0, %v1287
        %1289 = vmatmul.f32.gmra.mxu0 %v392
        %v1290 = vpop.f32.mrf.mxu0
        %v1291 = vadd.f32 0.0, %v1290
        %1292 = vmatmul.f32.gmra.mxu0 %v394
        %v1293 = vpop.f32.mrf.mxu0
        %v1294 = vadd.f32 0.0, %v1293
        %1295 = vmatmul.f32.gmra.mxu0 %v396
        %v1296 = vpop.f32.mrf.mxu0
        %v1297 = vadd.f32 0.0, %v1296
        %1298 = vmatmul.f32.gmra.mxu0 %v398
        %v1299 = vpop.f32.mrf.mxu0
        %v1300 = vadd.f32 0.0, %v1299
        %1301 = vmatmul.f32.gmra.mxu0 %v400
        %v1302 = vpop.f32.mrf.mxu0
        %v1303 = vadd.f32 0.0, %v1302
        %1304 = vmatmul.f32.gmra.mxu0 %v402
        %v1305 = vpop.f32.mrf.mxu0
        %v1306 = vadd.f32 0.0, %v1305
        %1307 = vmatmul.f32.gmra.mxu0 %v404
        %v1308 = vpop.f32.mrf.mxu0
        %v1309 = vadd.f32 0.0, %v1308
        %1310 = vmatmul.f32.gmra.mxu0 %v406
        %v1311 = vpop.f32.mrf.mxu0
        %v1312 = vadd.f32 0.0, %v1311
        %1313 = vmatmul.f32.gmra.mxu0 %v408
        %v1314 = vpop.f32.mrf.mxu0
        %v1315 = vadd.f32 0.0, %v1314
        %1316 = vdwg.mxu0
        %1317 = vmatpush.msra.mxu0 %v601
        %1318 = vmatpush.msra.mxu0 %v595
        %1319 = vmatpush.msra.mxu0 %v589
        %1320 = vmatpush.msra.mxu0 %v583
        %1321 = vmatpush.msra.mxu0 %v577
        %1322 = vmatpush.msra.mxu0 %v571
        %1323 = vmatpush.msra.mxu0 %v565
        %1324 = vmatpush.msra.mxu0 %v559
        %1325 = vmatpush.msra.mxu0 %v553
        %1326 = vmatpush.msra.mxu0 %v547
        %1327 = vmatpush.msra.mxu0 %v541
        %1328 = vmatpush.msra.mxu0 %v535
        %1329 = vmatpush.msra.mxu0 %v529
        %1330 = vmatpush.msra.mxu0 %v523
        %1331 = vmatpush.msra.mxu0 %v517
        %1332 = vmatpush.msra.mxu0 %v511
        %1333 = vmatmul.f32.gmra.mxu0 %v379
        %v1334 = vpop.f32.mrf.mxu0
        %v1335 = vadd.f32 %v1270, %v1334
        %1336 = vmatmul.f32.gmra.mxu0 %v381
        %v1337 = vpop.f32.mrf.mxu0
        %v1338 = vadd.f32 %v1273, %v1337
        %1339 = vmatmul.f32.gmra.mxu0 %v383
        %v1340 = vpop.f32.mrf.mxu0
        %v1341 = vadd.f32 %v1276, %v1340
        %1342 = vmatmul.f32.gmra.mxu0 %v385
        %v1343 = vpop.f32.mrf.mxu0
        %v1344 = vadd.f32 %v1279, %v1343
        %1345 = vmatmul.f32.gmra.mxu0 %v387
        %v1346 = vpop.f32.mrf.mxu0
        %v1347 = vadd.f32 %v1282, %v1346
        %1348 = vmatmul.f32.gmra.mxu0 %v389
        %v1349 = vpop.f32.mrf.mxu0
        %v1350 = vadd.f32 %v1285, %v1349
        %1351 = vmatmul.f32.gmra.mxu0 %v391
        %v1352 = vpop.f32.mrf.mxu0
        %v1353 = vadd.f32 %v1288, %v1352
        %1354 = vmatmul.f32.gmra.mxu0 %v393
        %v1355 = vpop.f32.mrf.mxu0
        %v1356 = vadd.f32 %v1291, %v1355
        %1357 = vmatmul.f32.gmra.mxu0 %v395
        %v1358 = vpop.f32.mrf.mxu0
        %v1359 = vadd.f32 %v1294, %v1358
        %1360 = vmatmul.f32.gmra.mxu0 %v397
        %v1361 = vpop.f32.mrf.mxu0
        %v1362 = vadd.f32 %v1297, %v1361
        %1363 = vmatmul.f32.gmra.mxu0 %v399
        %v1364 = vpop.f32.mrf.mxu0
        %v1365 = vadd.f32 %v1300, %v1364
        %1366 = vmatmul.f32.gmra.mxu0 %v401
        %v1367 = vpop.f32.mrf.mxu0
        %v1368 = vadd.f32 %v1303, %v1367
        %1369 = vmatmul.f32.gmra.mxu0 %v403
        %v1370 = vpop.f32.mrf.mxu0
        %v1371 = vadd.f32 %v1306, %v1370
        %1372 = vmatmul.f32.gmra.mxu0 %v405
        %v1373 = vpop.f32.mrf.mxu0
        %v1374 = vadd.f32 %v1309, %v1373
        %1375 = vmatmul.f32.gmra.mxu0 %v407
        %v1376 = vpop.f32.mrf.mxu0
        %v1377 = vadd.f32 %v1312, %v1376
        %1378 = vmatmul.f32.gmra.mxu0 %v409
        %v1379 = vpop.f32.mrf.mxu0
        %v1380 = vadd.f32 %v1315, %v1379
        %1381 = vdwg.mxu0
        %v1382 = vld [vmem:[%s367] sm:$0xff]
        %v1383 = vld [vmem:[%s367 + $0x8] sm:$0xff]
        %v1384 = vld [vmem:[%s367 + $0x10] sm:$0xff]
        %v1385 = vld [vmem:[%s367 + $0x18] sm:$0xff]
        %v1386 = vld [vmem:[%s367 + $0x20] sm:$0xff]
        %v1387 = vld [vmem:[%s367 + $0x28] sm:$0xff]
        %v1388 = vld [vmem:[%s367 + $0x30] sm:$0xff]
        %v1389 = vld [vmem:[%s367 + $0x38] sm:$0xff]
        %v1390 = vld [vmem:[%s367 + $0x40] sm:$0xff]
        %v1391 = vld [vmem:[%s367 + $0x48] sm:$0xff]
        %v1392 = vld [vmem:[%s367 + $0x50] sm:$0xff]
        %v1393 = vld [vmem:[%s367 + $0x58] sm:$0xff]
        %v1394 = vld [vmem:[%s367 + $0x60] sm:$0xff]
        %v1395 = vld [vmem:[%s367 + $0x68] sm:$0xff]
        %v1396 = vld [vmem:[%s367 + $0x70] sm:$0xff]
        %v1397 = vld [vmem:[%s367 + $0x78] sm:$0xff]
        %v1398 = vld [vmem:[%s373] sm:$0xff]
        %v1399 = vld [vmem:[%s373 + $0x8] sm:$0xff]
        %v1400 = vld [vmem:[%s373 + $0x10] sm:$0xff]
        %v1401 = vld [vmem:[%s373 + $0x18] sm:$0xff]
        %v1402 = vld [vmem:[%s373 + $0x20] sm:$0xff]
        %v1403 = vld [vmem:[%s373 + $0x28] sm:$0xff]
        %v1404 = vld [vmem:[%s373 + $0x30] sm:$0xff]
        %v1405 = vld [vmem:[%s373 + $0x38] sm:$0xff]
        %v1406 = vld [vmem:[%s373 + $0x40] sm:$0xff]
        %v1407 = vld [vmem:[%s373 + $0x48] sm:$0xff]
        %v1408 = vld [vmem:[%s373 + $0x50] sm:$0xff]
        %v1409 = vld [vmem:[%s373 + $0x58] sm:$0xff]
        %v1410 = vld [vmem:[%s373 + $0x60] sm:$0xff]
        %v1411 = vld [vmem:[%s373 + $0x68] sm:$0xff]
        %v1412 = vld [vmem:[%s373 + $0x70] sm:$0xff]
        %v1413 = vld [vmem:[%s373 + $0x78] sm:$0xff]
        %v1414 = vmul.f32 %v685, %v1382
        %v1415 = vmul.f32 %v688, %v1383
        %v1416 = vmul.f32 %v691, %v1384
        %v1417 = vmul.f32 %v694, %v1385
        %v1418 = vmul.f32 %v697, %v1386
        %v1419 = vmul.f32 %v700, %v1387
        %v1420 = vmul.f32 %v703, %v1388
        %v1421 = vmul.f32 %v706, %v1389
        %v1422 = vmul.f32 %v709, %v1390
        %v1423 = vmul.f32 %v712, %v1391
        %v1424 = vmul.f32 %v715, %v1392
        %v1425 = vmul.f32 %v718, %v1393
        %v1426 = vmul.f32 %v721, %v1394
        %v1427 = vmul.f32 %v724, %v1395
        %v1428 = vmul.f32 %v727, %v1396
        %v1429 = vmul.f32 %v730, %v1397
        %1446 = vrot.lane.b32.xlu0 %v1398, 64
        %v1447 = vpop.permute.xlu0 %1446
        %1448 = vrot.lane.b32.xlu0 %v1399, 64
        %v1449 = vpop.permute.xlu0 %1448
        %1450 = vrot.lane.b32.xlu0 %v1400, 64
        %v1451 = vpop.permute.xlu0 %1450
        %1452 = vrot.lane.b32.xlu0 %v1401, 64
        %v1453 = vpop.permute.xlu0 %1452
        %1454 = vrot.lane.b32.xlu0 %v1402, 64
        %v1455 = vpop.permute.xlu0 %1454
        %1456 = vrot.lane.b32.xlu0 %v1403, 64
        %v1457 = vpop.permute.xlu0 %1456
        %1458 = vrot.lane.b32.xlu0 %v1404, 64
        %v1459 = vpop.permute.xlu0 %1458
        %1460 = vrot.lane.b32.xlu0 %v1405, 64
        %v1461 = vpop.permute.xlu0 %1460
        %1462 = vrot.lane.b32.xlu0 %v1406, 64
        %v1463 = vpop.permute.xlu0 %1462
        %1464 = vrot.lane.b32.xlu0 %v1407, 64
        %v1465 = vpop.permute.xlu0 %1464
        %1466 = vrot.lane.b32.xlu0 %v1408, 64
        %v1467 = vpop.permute.xlu0 %1466
        %1468 = vrot.lane.b32.xlu0 %v1409, 64
        %v1469 = vpop.permute.xlu0 %1468
        %1470 = vrot.lane.b32.xlu0 %v1410, 64
        %v1471 = vpop.permute.xlu0 %1470
        %1472 = vrot.lane.b32.xlu0 %v1411, 64
        %v1473 = vpop.permute.xlu0 %1472
        %1474 = vrot.lane.b32.xlu0 %v1412, 64
        %v1475 = vpop.permute.xlu0 %1474
        %1476 = vrot.lane.b32.xlu0 %v1413, 64
        %v1477 = vpop.permute.xlu0 %1476
        %v1494 = vmul.f32 %v685, %v1447
        %v1495 = vmul.f32 %v688, %v1449
        %v1496 = vmul.f32 %v691, %v1451
        %v1497 = vmul.f32 %v694, %v1453
        %v1498 = vmul.f32 %v697, %v1455
        %v1499 = vmul.f32 %v700, %v1457
        %v1500 = vmul.f32 %v703, %v1459
        %v1501 = vmul.f32 %v706, %v1461
        %v1502 = vmul.f32 %v709, %v1463
        %v1503 = vmul.f32 %v712, %v1465
        %v1504 = vmul.f32 %v715, %v1467
        %v1505 = vmul.f32 %v718, %v1469
        %v1506 = vmul.f32 %v721, %v1471
        %v1507 = vmul.f32 %v724, %v1473
        %v1508 = vmul.f32 %v727, %v1475
        %v1509 = vmul.f32 %v730, %v1477
        %1526 = vrot.lane.b32.xlu0 %v1494, 64
        %v1527 = vpop.permute.xlu0 %1526
        %1528 = vrot.lane.b32.xlu0 %v1495, 64
        %v1529 = vpop.permute.xlu0 %1528
        %1530 = vrot.lane.b32.xlu0 %v1496, 64
        %v1531 = vpop.permute.xlu0 %1530
        %1532 = vrot.lane.b32.xlu0 %v1497, 64
        %v1533 = vpop.permute.xlu0 %1532
        %1534 = vrot.lane.b32.xlu0 %v1498, 64
        %v1535 = vpop.permute.xlu0 %1534
        %1536 = vrot.lane.b32.xlu0 %v1499, 64
        %v1537 = vpop.permute.xlu0 %1536
        %1538 = vrot.lane.b32.xlu0 %v1500, 64
        %v1539 = vpop.permute.xlu0 %1538
        %1540 = vrot.lane.b32.xlu0 %v1501, 64
        %v1541 = vpop.permute.xlu0 %1540
        %1542 = vrot.lane.b32.xlu0 %v1502, 64
        %v1543 = vpop.permute.xlu0 %1542
        %1544 = vrot.lane.b32.xlu0 %v1503, 64
        %v1545 = vpop.permute.xlu0 %1544
        %1546 = vrot.lane.b32.xlu0 %v1504, 64
        %v1547 = vpop.permute.xlu0 %1546
        %1548 = vrot.lane.b32.xlu0 %v1505, 64
        %v1549 = vpop.permute.xlu0 %1548
        %1550 = vrot.lane.b32.xlu0 %v1506, 64
        %v1551 = vpop.permute.xlu0 %1550
        %1552 = vrot.lane.b32.xlu0 %v1507, 64
        %v1553 = vpop.permute.xlu0 %1552
        %1554 = vrot.lane.b32.xlu0 %v1508, 64
        %v1555 = vpop.permute.xlu0 %1554
        %1556 = vrot.lane.b32.xlu0 %v1509, 64
        %v1557 = vpop.permute.xlu0 %1556
        %v1574 = vsub.f32 %v1414, %v1527
        %v1575 = vsub.f32 %v1415, %v1529
        %v1576 = vsub.f32 %v1416, %v1531
        %v1577 = vsub.f32 %v1417, %v1533
        %v1578 = vsub.f32 %v1418, %v1535
        %v1579 = vsub.f32 %v1419, %v1537
        %v1580 = vsub.f32 %v1420, %v1539
        %v1581 = vsub.f32 %v1421, %v1541
        %v1582 = vsub.f32 %v1422, %v1543
        %v1583 = vsub.f32 %v1423, %v1545
        %v1584 = vsub.f32 %v1424, %v1547
        %v1585 = vsub.f32 %v1425, %v1549
        %v1586 = vsub.f32 %v1426, %v1551
        %v1587 = vsub.f32 %v1427, %v1553
        %v1588 = vsub.f32 %v1428, %v1555
        %v1589 = vsub.f32 %v1429, %v1557
        %v1590 = vmul.f32 %v685, %v1398
        %v1591 = vmul.f32 %v688, %v1399
        %v1592 = vmul.f32 %v691, %v1400
        %v1593 = vmul.f32 %v694, %v1401
        %v1594 = vmul.f32 %v697, %v1402
        %v1595 = vmul.f32 %v700, %v1403
        %v1596 = vmul.f32 %v703, %v1404
        %v1597 = vmul.f32 %v706, %v1405
        %v1598 = vmul.f32 %v709, %v1406
        %v1599 = vmul.f32 %v712, %v1407
        %v1600 = vmul.f32 %v715, %v1408
        %v1601 = vmul.f32 %v718, %v1409
        %v1602 = vmul.f32 %v721, %v1410
        %v1603 = vmul.f32 %v724, %v1411
        %v1604 = vmul.f32 %v727, %v1412
        %v1605 = vmul.f32 %v730, %v1413
        %1622 = vrot.lane.b32.xlu0 %v1382, 64
        %v1623 = vpop.permute.xlu0 %1622
        %1624 = vrot.lane.b32.xlu0 %v1383, 64
        %v1625 = vpop.permute.xlu0 %1624
        %1626 = vrot.lane.b32.xlu0 %v1384, 64
        %v1627 = vpop.permute.xlu0 %1626
        %1628 = vrot.lane.b32.xlu0 %v1385, 64
        %v1629 = vpop.permute.xlu0 %1628
        %1630 = vrot.lane.b32.xlu0 %v1386, 64
        %v1631 = vpop.permute.xlu0 %1630
        %1632 = vrot.lane.b32.xlu0 %v1387, 64
        %v1633 = vpop.permute.xlu0 %1632
        %1634 = vrot.lane.b32.xlu0 %v1388, 64
        %v1635 = vpop.permute.xlu0 %1634
        %1636 = vrot.lane.b32.xlu0 %v1389, 64
        %v1637 = vpop.permute.xlu0 %1636
        %1638 = vrot.lane.b32.xlu0 %v1390, 64
        %v1639 = vpop.permute.xlu0 %1638
        %1640 = vrot.lane.b32.xlu0 %v1391, 64
        %v1641 = vpop.permute.xlu0 %1640
        %1642 = vrot.lane.b32.xlu0 %v1392, 64
        %v1643 = vpop.permute.xlu0 %1642
        %1644 = vrot.lane.b32.xlu0 %v1393, 64
        %v1645 = vpop.permute.xlu0 %1644
        %1646 = vrot.lane.b32.xlu0 %v1394, 64
        %v1647 = vpop.permute.xlu0 %1646
        %1648 = vrot.lane.b32.xlu0 %v1395, 64
        %v1649 = vpop.permute.xlu0 %1648
        %1650 = vrot.lane.b32.xlu0 %v1396, 64
        %v1651 = vpop.permute.xlu0 %1650
        %1652 = vrot.lane.b32.xlu0 %v1397, 64
        %v1653 = vpop.permute.xlu0 %1652
        %v1670 = vmul.f32 %v685, %v1623
        %v1671 = vmul.f32 %v688, %v1625
        %v1672 = vmul.f32 %v691, %v1627
        %v1673 = vmul.f32 %v694, %v1629
        %v1674 = vmul.f32 %v697, %v1631
        %v1675 = vmul.f32 %v700, %v1633
        %v1676 = vmul.f32 %v703, %v1635
        %v1677 = vmul.f32 %v706, %v1637
        %v1678 = vmul.f32 %v709, %v1639
        %v1679 = vmul.f32 %v712, %v1641
        %v1680 = vmul.f32 %v715, %v1643
        %v1681 = vmul.f32 %v718, %v1645
        %v1682 = vmul.f32 %v721, %v1647
        %v1683 = vmul.f32 %v724, %v1649
        %v1684 = vmul.f32 %v727, %v1651
        %v1685 = vmul.f32 %v730, %v1653
        %1702 = vrot.lane.b32.xlu0 %v1670, 64
        %v1703 = vpop.permute.xlu0 %1702
        %1704 = vrot.lane.b32.xlu0 %v1671, 64
        %v1705 = vpop.permute.xlu0 %1704
        %1706 = vrot.lane.b32.xlu0 %v1672, 64
        %v1707 = vpop.permute.xlu0 %1706
        %1708 = vrot.lane.b32.xlu0 %v1673, 64
        %v1709 = vpop.permute.xlu0 %1708
        %1710 = vrot.lane.b32.xlu0 %v1674, 64
        %v1711 = vpop.permute.xlu0 %1710
        %1712 = vrot.lane.b32.xlu0 %v1675, 64
        %v1713 = vpop.permute.xlu0 %1712
        %1714 = vrot.lane.b32.xlu0 %v1676, 64
        %v1715 = vpop.permute.xlu0 %1714
        %1716 = vrot.lane.b32.xlu0 %v1677, 64
        %v1717 = vpop.permute.xlu0 %1716
        %1718 = vrot.lane.b32.xlu0 %v1678, 64
        %v1719 = vpop.permute.xlu0 %1718
        %1720 = vrot.lane.b32.xlu0 %v1679, 64
        %v1721 = vpop.permute.xlu0 %1720
        %1722 = vrot.lane.b32.xlu0 %v1680, 64
        %v1723 = vpop.permute.xlu0 %1722
        %1724 = vrot.lane.b32.xlu0 %v1681, 64
        %v1725 = vpop.permute.xlu0 %1724
        %1726 = vrot.lane.b32.xlu0 %v1682, 64
        %v1727 = vpop.permute.xlu0 %1726
        %1728 = vrot.lane.b32.xlu0 %v1683, 64
        %v1729 = vpop.permute.xlu0 %1728
        %1730 = vrot.lane.b32.xlu0 %v1684, 64
        %v1731 = vpop.permute.xlu0 %1730
        %1732 = vrot.lane.b32.xlu0 %v1685, 64
        %v1733 = vpop.permute.xlu0 %1732
        %v1750 = vadd.f32 %v1590, %v1703
        %v1751 = vadd.f32 %v1591, %v1705
        %v1752 = vadd.f32 %v1592, %v1707
        %v1753 = vadd.f32 %v1593, %v1709
        %v1754 = vadd.f32 %v1594, %v1711
        %v1755 = vadd.f32 %v1595, %v1713
        %v1756 = vadd.f32 %v1596, %v1715
        %v1757 = vadd.f32 %v1597, %v1717
        %v1758 = vadd.f32 %v1598, %v1719
        %v1759 = vadd.f32 %v1599, %v1721
        %v1760 = vadd.f32 %v1600, %v1723
        %v1761 = vadd.f32 %v1601, %v1725
        %v1762 = vadd.f32 %v1602, %v1727
        %v1763 = vadd.f32 %v1603, %v1729
        %v1764 = vadd.f32 %v1604, %v1731
        %v1765 = vadd.f32 %v1605, %v1733
        %1782 = vrot.lane.b32.xlu0 %v1750, 64
        %v1783 = vpop.permute.xlu0 %1782
        %1784 = vrot.lane.b32.xlu0 %v1751, 64
        %v1785 = vpop.permute.xlu0 %1784
        %1786 = vrot.lane.b32.xlu0 %v1752, 64
        %v1787 = vpop.permute.xlu0 %1786
        %1788 = vrot.lane.b32.xlu0 %v1753, 64
        %v1789 = vpop.permute.xlu0 %1788
        %1790 = vrot.lane.b32.xlu0 %v1754, 64
        %v1791 = vpop.permute.xlu0 %1790
        %1792 = vrot.lane.b32.xlu0 %v1755, 64
        %v1793 = vpop.permute.xlu0 %1792
        %1794 = vrot.lane.b32.xlu0 %v1756, 64
        %v1795 = vpop.permute.xlu0 %1794
        %1796 = vrot.lane.b32.xlu0 %v1757, 64
        %v1797 = vpop.permute.xlu0 %1796
        %1798 = vrot.lane.b32.xlu0 %v1758, 64
        %v1799 = vpop.permute.xlu0 %1798
        %1800 = vrot.lane.b32.xlu0 %v1759, 64
        %v1801 = vpop.permute.xlu0 %1800
        %1802 = vrot.lane.b32.xlu0 %v1760, 64
        %v1803 = vpop.permute.xlu0 %1802
        %1804 = vrot.lane.b32.xlu0 %v1761, 64
        %v1805 = vpop.permute.xlu0 %1804
        %1806 = vrot.lane.b32.xlu0 %v1762, 64
        %v1807 = vpop.permute.xlu0 %1806
        %1808 = vrot.lane.b32.xlu0 %v1763, 64
        %v1809 = vpop.permute.xlu0 %1808
        %1810 = vrot.lane.b32.xlu0 %v1764, 64
        %v1811 = vpop.permute.xlu0 %1810
        %1812 = vrot.lane.b32.xlu0 %v1765, 64
        %v1813 = vpop.permute.xlu0 %1812
        %vm1830 = vcmask 523264
        %v1831 = vsel %vm1830, %v1574, %v1783
        %v1832 = vsel %vm1830, %v1575, %v1785
        %v1833 = vsel %vm1830, %v1576, %v1787
        %v1834 = vsel %vm1830, %v1577, %v1789
        %v1835 = vsel %vm1830, %v1578, %v1791
        %v1836 = vsel %vm1830, %v1579, %v1793
        %v1837 = vsel %vm1830, %v1580, %v1795
        %v1838 = vsel %vm1830, %v1581, %v1797
        %v1839 = vsel %vm1830, %v1582, %v1799
        %v1840 = vsel %vm1830, %v1583, %v1801
        %v1841 = vsel %vm1830, %v1584, %v1803
        %v1842 = vsel %vm1830, %v1585, %v1805
        %v1843 = vsel %vm1830, %v1586, %v1807
        %v1844 = vsel %vm1830, %v1587, %v1809
        %v1845 = vsel %vm1830, %v1588, %v1811
        %v1846 = vsel %vm1830, %v1589, %v1813
        %1847 = vst [vmem:[%s347] sm:$0xff] %v1831
        %1848 = vst [vmem:[%s347 + $0x8] sm:$0xff] %v1832
        %1849 = vst [vmem:[%s347 + $0x10] sm:$0xff] %v1833
        %1850 = vst [vmem:[%s347 + $0x18] sm:$0xff] %v1834
        %1851 = vst [vmem:[%s347 + $0x20] sm:$0xff] %v1835
        %1852 = vst [vmem:[%s347 + $0x28] sm:$0xff] %v1836
        %1853 = vst [vmem:[%s347 + $0x30] sm:$0xff] %v1837
        %1854 = vst [vmem:[%s347 + $0x38] sm:$0xff] %v1838
        %1855 = vst [vmem:[%s347 + $0x40] sm:$0xff] %v1839
        %1856 = vst [vmem:[%s347 + $0x48] sm:$0xff] %v1840
        %1857 = vst [vmem:[%s347 + $0x50] sm:$0xff] %v1841
        %1858 = vst [vmem:[%s347 + $0x58] sm:$0xff] %v1842
        %1859 = vst [vmem:[%s347 + $0x60] sm:$0xff] %v1843
        %1860 = vst [vmem:[%s347 + $0x68] sm:$0xff] %v1844
        %1861 = vst [vmem:[%s347 + $0x70] sm:$0xff] %v1845
        %1862 = vst [vmem:[%s347 + $0x78] sm:$0xff] %v1846
        %v1863 = vmul.f32 %v945, %v1382
        %v1864 = vmul.f32 %v948, %v1383
        %v1865 = vmul.f32 %v951, %v1384
        %v1866 = vmul.f32 %v954, %v1385
        %v1867 = vmul.f32 %v957, %v1386
        %v1868 = vmul.f32 %v960, %v1387
        %v1869 = vmul.f32 %v963, %v1388
        %v1870 = vmul.f32 %v966, %v1389
        %v1871 = vmul.f32 %v969, %v1390
        %v1872 = vmul.f32 %v972, %v1391
        %v1873 = vmul.f32 %v975, %v1392
        %v1874 = vmul.f32 %v978, %v1393
        %v1875 = vmul.f32 %v981, %v1394
        %v1876 = vmul.f32 %v984, %v1395
        %v1877 = vmul.f32 %v987, %v1396
        %v1878 = vmul.f32 %v990, %v1397
        %v1879 = vmul.f32 %v945, %v1447
        %v1880 = vmul.f32 %v948, %v1449
        %v1881 = vmul.f32 %v951, %v1451
        %v1882 = vmul.f32 %v954, %v1453
        %v1883 = vmul.f32 %v957, %v1455
        %v1884 = vmul.f32 %v960, %v1457
        %v1885 = vmul.f32 %v963, %v1459
        %v1886 = vmul.f32 %v966, %v1461
        %v1887 = vmul.f32 %v969, %v1463
        %v1888 = vmul.f32 %v972, %v1465
        %v1889 = vmul.f32 %v975, %v1467
        %v1890 = vmul.f32 %v978, %v1469
        %v1891 = vmul.f32 %v981, %v1471
        %v1892 = vmul.f32 %v984, %v1473
        %v1893 = vmul.f32 %v987, %v1475
        %v1894 = vmul.f32 %v990, %v1477
        %1911 = vrot.lane.b32.xlu0 %v1879, 64
        %v1912 = vpop.permute.xlu0 %1911
        %1913 = vrot.lane.b32.xlu0 %v1880, 64
        %v1914 = vpop.permute.xlu0 %1913
        %1915 = vrot.lane.b32.xlu0 %v1881, 64
        %v1916 = vpop.permute.xlu0 %1915
        %1917 = vrot.lane.b32.xlu0 %v1882, 64
        %v1918 = vpop.permute.xlu0 %1917
        %1919 = vrot.lane.b32.xlu0 %v1883, 64
        %v1920 = vpop.permute.xlu0 %1919
        %1921 = vrot.lane.b32.xlu0 %v1884, 64
        %v1922 = vpop.permute.xlu0 %1921
        %1923 = vrot.lane.b32.xlu0 %v1885, 64
        %v1924 = vpop.permute.xlu0 %1923
        %1925 = vrot.lane.b32.xlu0 %v1886, 64
        %v1926 = vpop.permute.xlu0 %1925
        %1927 = vrot.lane.b32.xlu0 %v1887, 64
        %v1928 = vpop.permute.xlu0 %1927
        %1929 = vrot.lane.b32.xlu0 %v1888, 64
        %v1930 = vpop.permute.xlu0 %1929
        %1931 = vrot.lane.b32.xlu0 %v1889, 64
        %v1932 = vpop.permute.xlu0 %1931
        %1933 = vrot.lane.b32.xlu0 %v1890, 64
        %v1934 = vpop.permute.xlu0 %1933
        %1935 = vrot.lane.b32.xlu0 %v1891, 64
        %v1936 = vpop.permute.xlu0 %1935
        %1937 = vrot.lane.b32.xlu0 %v1892, 64
        %v1938 = vpop.permute.xlu0 %1937
        %1939 = vrot.lane.b32.xlu0 %v1893, 64
        %v1940 = vpop.permute.xlu0 %1939
        %1941 = vrot.lane.b32.xlu0 %v1894, 64
        %v1942 = vpop.permute.xlu0 %1941
        %v1959 = vsub.f32 %v1863, %v1912
        %v1960 = vsub.f32 %v1864, %v1914
        %v1961 = vsub.f32 %v1865, %v1916
        %v1962 = vsub.f32 %v1866, %v1918
        %v1963 = vsub.f32 %v1867, %v1920
        %v1964 = vsub.f32 %v1868, %v1922
        %v1965 = vsub.f32 %v1869, %v1924
        %v1966 = vsub.f32 %v1870, %v1926
        %v1967 = vsub.f32 %v1871, %v1928
        %v1968 = vsub.f32 %v1872, %v1930
        %v1969 = vsub.f32 %v1873, %v1932
        %v1970 = vsub.f32 %v1874, %v1934
        %v1971 = vsub.f32 %v1875, %v1936
        %v1972 = vsub.f32 %v1876, %v1938
        %v1973 = vsub.f32 %v1877, %v1940
        %v1974 = vsub.f32 %v1878, %v1942
        %v1975 = vmul.f32 %v945, %v1398
        %v1976 = vmul.f32 %v948, %v1399
        %v1977 = vmul.f32 %v951, %v1400
        %v1978 = vmul.f32 %v954, %v1401
        %v1979 = vmul.f32 %v957, %v1402
        %v1980 = vmul.f32 %v960, %v1403
        %v1981 = vmul.f32 %v963, %v1404
        %v1982 = vmul.f32 %v966, %v1405
        %v1983 = vmul.f32 %v969, %v1406
        %v1984 = vmul.f32 %v972, %v1407
        %v1985 = vmul.f32 %v975, %v1408
        %v1986 = vmul.f32 %v978, %v1409
        %v1987 = vmul.f32 %v981, %v1410
        %v1988 = vmul.f32 %v984, %v1411
        %v1989 = vmul.f32 %v987, %v1412
        %v1990 = vmul.f32 %v990, %v1413
        %v1991 = vmul.f32 %v945, %v1623
        %v1992 = vmul.f32 %v948, %v1625
        %v1993 = vmul.f32 %v951, %v1627
        %v1994 = vmul.f32 %v954, %v1629
        %v1995 = vmul.f32 %v957, %v1631
        %v1996 = vmul.f32 %v960, %v1633
        %v1997 = vmul.f32 %v963, %v1635
        %v1998 = vmul.f32 %v966, %v1637
        %v1999 = vmul.f32 %v969, %v1639
        %v2000 = vmul.f32 %v972, %v1641
        %v2001 = vmul.f32 %v975, %v1643
        %v2002 = vmul.f32 %v978, %v1645
        %v2003 = vmul.f32 %v981, %v1647
        %v2004 = vmul.f32 %v984, %v1649
        %v2005 = vmul.f32 %v987, %v1651
        %v2006 = vmul.f32 %v990, %v1653
        %2023 = vrot.lane.b32.xlu0 %v1991, 64
        %v2024 = vpop.permute.xlu0 %2023
        %2025 = vrot.lane.b32.xlu0 %v1992, 64
        %v2026 = vpop.permute.xlu0 %2025
        %2027 = vrot.lane.b32.xlu0 %v1993, 64
        %v2028 = vpop.permute.xlu0 %2027
        %2029 = vrot.lane.b32.xlu0 %v1994, 64
        %v2030 = vpop.permute.xlu0 %2029
        %2031 = vrot.lane.b32.xlu0 %v1995, 64
        %v2032 = vpop.permute.xlu0 %2031
        %2033 = vrot.lane.b32.xlu0 %v1996, 64
        %v2034 = vpop.permute.xlu0 %2033
        %2035 = vrot.lane.b32.xlu0 %v1997, 64
        %v2036 = vpop.permute.xlu0 %2035
        %2037 = vrot.lane.b32.xlu0 %v1998, 64
        %v2038 = vpop.permute.xlu0 %2037
        %2039 = vrot.lane.b32.xlu0 %v1999, 64
        %v2040 = vpop.permute.xlu0 %2039
        %2041 = vrot.lane.b32.xlu0 %v2000, 64
        %v2042 = vpop.permute.xlu0 %2041
        %2043 = vrot.lane.b32.xlu0 %v2001, 64
        %v2044 = vpop.permute.xlu0 %2043
        %2045 = vrot.lane.b32.xlu0 %v2002, 64
        %v2046 = vpop.permute.xlu0 %2045
        %2047 = vrot.lane.b32.xlu0 %v2003, 64
        %v2048 = vpop.permute.xlu0 %2047
        %2049 = vrot.lane.b32.xlu0 %v2004, 64
        %v2050 = vpop.permute.xlu0 %2049
        %2051 = vrot.lane.b32.xlu0 %v2005, 64
        %v2052 = vpop.permute.xlu0 %2051
        %2053 = vrot.lane.b32.xlu0 %v2006, 64
        %v2054 = vpop.permute.xlu0 %2053
        %v2071 = vadd.f32 %v1975, %v2024
        %v2072 = vadd.f32 %v1976, %v2026
        %v2073 = vadd.f32 %v1977, %v2028
        %v2074 = vadd.f32 %v1978, %v2030
        %v2075 = vadd.f32 %v1979, %v2032
        %v2076 = vadd.f32 %v1980, %v2034
        %v2077 = vadd.f32 %v1981, %v2036
        %v2078 = vadd.f32 %v1982, %v2038
        %v2079 = vadd.f32 %v1983, %v2040
        %v2080 = vadd.f32 %v1984, %v2042
        %v2081 = vadd.f32 %v1985, %v2044
        %v2082 = vadd.f32 %v1986, %v2046
        %v2083 = vadd.f32 %v1987, %v2048
        %v2084 = vadd.f32 %v1988, %v2050
        %v2085 = vadd.f32 %v1989, %v2052
        %v2086 = vadd.f32 %v1990, %v2054
        %2103 = vrot.lane.b32.xlu0 %v2071, 64
        %v2104 = vpop.permute.xlu0 %2103
        %2105 = vrot.lane.b32.xlu0 %v2072, 64
        %v2106 = vpop.permute.xlu0 %2105
        %2107 = vrot.lane.b32.xlu0 %v2073, 64
        %v2108 = vpop.permute.xlu0 %2107
        %2109 = vrot.lane.b32.xlu0 %v2074, 64
        %v2110 = vpop.permute.xlu0 %2109
        %2111 = vrot.lane.b32.xlu0 %v2075, 64
        %v2112 = vpop.permute.xlu0 %2111
        %2113 = vrot.lane.b32.xlu0 %v2076, 64
        %v2114 = vpop.permute.xlu0 %2113
        %2115 = vrot.lane.b32.xlu0 %v2077, 64
        %v2116 = vpop.permute.xlu0 %2115
        %2117 = vrot.lane.b32.xlu0 %v2078, 64
        %v2118 = vpop.permute.xlu0 %2117
        %2119 = vrot.lane.b32.xlu0 %v2079, 64
        %v2120 = vpop.permute.xlu0 %2119
        %2121 = vrot.lane.b32.xlu0 %v2080, 64
        %v2122 = vpop.permute.xlu0 %2121
        %2123 = vrot.lane.b32.xlu0 %v2081, 64
        %v2124 = vpop.permute.xlu0 %2123
        %2125 = vrot.lane.b32.xlu0 %v2082, 64
        %v2126 = vpop.permute.xlu0 %2125
        %2127 = vrot.lane.b32.xlu0 %v2083, 64
        %v2128 = vpop.permute.xlu0 %2127
        %2129 = vrot.lane.b32.xlu0 %v2084, 64
        %v2130 = vpop.permute.xlu0 %2129
        %2131 = vrot.lane.b32.xlu0 %v2085, 64
        %v2132 = vpop.permute.xlu0 %2131
        %2133 = vrot.lane.b32.xlu0 %v2086, 64
        %v2134 = vpop.permute.xlu0 %2133
        %v2151 = vsel %vm1830, %v1959, %v2104
        %v2152 = vsel %vm1830, %v1960, %v2106
        %v2153 = vsel %vm1830, %v1961, %v2108
        %v2154 = vsel %vm1830, %v1962, %v2110
        %v2155 = vsel %vm1830, %v1963, %v2112
        %v2156 = vsel %vm1830, %v1964, %v2114
        %v2157 = vsel %vm1830, %v1965, %v2116
        %v2158 = vsel %vm1830, %v1966, %v2118
        %v2159 = vsel %vm1830, %v1967, %v2120
        %v2160 = vsel %vm1830, %v1968, %v2122
        %v2161 = vsel %vm1830, %v1969, %v2124
        %v2162 = vsel %vm1830, %v1970, %v2126
        %v2163 = vsel %vm1830, %v1971, %v2128
        %v2164 = vsel %vm1830, %v1972, %v2130
        %v2165 = vsel %vm1830, %v1973, %v2132
        %v2166 = vsel %vm1830, %v1974, %v2134
        %2167 = vst [vmem:[%s354] sm:$0xff] %v2151
        %2168 = vst [vmem:[%s354 + $0x8] sm:$0xff] %v2152
        %2169 = vst [vmem:[%s354 + $0x10] sm:$0xff] %v2153
        %2170 = vst [vmem:[%s354 + $0x18] sm:$0xff] %v2154
        %2171 = vst [vmem:[%s354 + $0x20] sm:$0xff] %v2155
        %2172 = vst [vmem:[%s354 + $0x28] sm:$0xff] %v2156
        %2173 = vst [vmem:[%s354 + $0x30] sm:$0xff] %v2157
        %2174 = vst [vmem:[%s354 + $0x38] sm:$0xff] %v2158
        %2175 = vst [vmem:[%s354 + $0x40] sm:$0xff] %v2159
        %2176 = vst [vmem:[%s354 + $0x48] sm:$0xff] %v2160
        %2177 = vst [vmem:[%s354 + $0x50] sm:$0xff] %v2161
        %2178 = vst [vmem:[%s354 + $0x58] sm:$0xff] %v2162
        %2179 = vst [vmem:[%s354 + $0x60] sm:$0xff] %v2163
        %2180 = vst [vmem:[%s354 + $0x68] sm:$0xff] %v2164
        %2181 = vst [vmem:[%s354 + $0x70] sm:$0xff] %v2165
        %2182 = vst [vmem:[%s354 + $0x78] sm:$0xff] %v2166
        %2183 = vst [vmem:[%s361] sm:$0xff] %v1205
        %2184 = vst [vmem:[%s361 + $0x8] sm:$0xff] %v1208
        %2185 = vst [vmem:[%s361 + $0x10] sm:$0xff] %v1211
        %2186 = vst [vmem:[%s361 + $0x18] sm:$0xff] %v1214
        %2187 = vst [vmem:[%s361 + $0x20] sm:$0xff] %v1217
        %2188 = vst [vmem:[%s361 + $0x28] sm:$0xff] %v1220
        %2189 = vst [vmem:[%s361 + $0x30] sm:$0xff] %v1223
        %2190 = vst [vmem:[%s361 + $0x38] sm:$0xff] %v1226
        %2191 = vst [vmem:[%s361 + $0x40] sm:$0xff] %v1229
        %2192 = vst [vmem:[%s361 + $0x48] sm:$0xff] %v1232
        %2193 = vst [vmem:[%s361 + $0x50] sm:$0xff] %v1235
        %2194 = vst [vmem:[%s361 + $0x58] sm:$0xff] %v1238
        %2195 = vst [vmem:[%s361 + $0x60] sm:$0xff] %v1241
        %2196 = vst [vmem:[%s361 + $0x68] sm:$0xff] %v1244
        %2197 = vst [vmem:[%s361 + $0x70] sm:$0xff] %v1247
        %2198 = vst [vmem:[%s361 + $0x78] sm:$0xff] %v1250
        %v2199 = vmul.f32 %v815, %v1382
        %v2200 = vmul.f32 %v818, %v1383
        %v2201 = vmul.f32 %v821, %v1384
        %v2202 = vmul.f32 %v824, %v1385
        %v2203 = vmul.f32 %v827, %v1386
        %v2204 = vmul.f32 %v830, %v1387
        %v2205 = vmul.f32 %v833, %v1388
        %v2206 = vmul.f32 %v836, %v1389
        %v2207 = vmul.f32 %v839, %v1390
        %v2208 = vmul.f32 %v842, %v1391
        %v2209 = vmul.f32 %v845, %v1392
        %v2210 = vmul.f32 %v848, %v1393
        %v2211 = vmul.f32 %v851, %v1394
        %v2212 = vmul.f32 %v854, %v1395
        %v2213 = vmul.f32 %v857, %v1396
        %v2214 = vmul.f32 %v860, %v1397
        %v2215 = vmul.f32 %v815, %v1447
        %v2216 = vmul.f32 %v818, %v1449
        %v2217 = vmul.f32 %v821, %v1451
        %v2218 = vmul.f32 %v824, %v1453
        %v2219 = vmul.f32 %v827, %v1455
        %v2220 = vmul.f32 %v830, %v1457
        %v2221 = vmul.f32 %v833, %v1459
        %v2222 = vmul.f32 %v836, %v1461
        %v2223 = vmul.f32 %v839, %v1463
        %v2224 = vmul.f32 %v842, %v1465
        %v2225 = vmul.f32 %v845, %v1467
        %v2226 = vmul.f32 %v848, %v1469
        %v2227 = vmul.f32 %v851, %v1471
        %v2228 = vmul.f32 %v854, %v1473
        %v2229 = vmul.f32 %v857, %v1475
        %v2230 = vmul.f32 %v860, %v1477
        %2247 = vrot.lane.b32.xlu0 %v2215, 64
        %v2248 = vpop.permute.xlu0 %2247
        %2249 = vrot.lane.b32.xlu0 %v2216, 64
        %v2250 = vpop.permute.xlu0 %2249
        %2251 = vrot.lane.b32.xlu0 %v2217, 64
        %v2252 = vpop.permute.xlu0 %2251
        %2253 = vrot.lane.b32.xlu0 %v2218, 64
        %v2254 = vpop.permute.xlu0 %2253
        %2255 = vrot.lane.b32.xlu0 %v2219, 64
        %v2256 = vpop.permute.xlu0 %2255
        %2257 = vrot.lane.b32.xlu0 %v2220, 64
        %v2258 = vpop.permute.xlu0 %2257
        %2259 = vrot.lane.b32.xlu0 %v2221, 64
        %v2260 = vpop.permute.xlu0 %2259
        %2261 = vrot.lane.b32.xlu0 %v2222, 64
        %v2262 = vpop.permute.xlu0 %2261
        %2263 = vrot.lane.b32.xlu0 %v2223, 64
        %v2264 = vpop.permute.xlu0 %2263
        %2265 = vrot.lane.b32.xlu0 %v2224, 64
        %v2266 = vpop.permute.xlu0 %2265
        %2267 = vrot.lane.b32.xlu0 %v2225, 64
        %v2268 = vpop.permute.xlu0 %2267
        %2269 = vrot.lane.b32.xlu0 %v2226, 64
        %v2270 = vpop.permute.xlu0 %2269
        %2271 = vrot.lane.b32.xlu0 %v2227, 64
        %v2272 = vpop.permute.xlu0 %2271
        %2273 = vrot.lane.b32.xlu0 %v2228, 64
        %v2274 = vpop.permute.xlu0 %2273
        %2275 = vrot.lane.b32.xlu0 %v2229, 64
        %v2276 = vpop.permute.xlu0 %2275
        %2277 = vrot.lane.b32.xlu0 %v2230, 64
        %v2278 = vpop.permute.xlu0 %2277
        %v2295 = vsub.f32 %v2199, %v2248
        %v2296 = vsub.f32 %v2200, %v2250
        %v2297 = vsub.f32 %v2201, %v2252
        %v2298 = vsub.f32 %v2202, %v2254
        %v2299 = vsub.f32 %v2203, %v2256
        %v2300 = vsub.f32 %v2204, %v2258
        %v2301 = vsub.f32 %v2205, %v2260
        %v2302 = vsub.f32 %v2206, %v2262
        %v2303 = vsub.f32 %v2207, %v2264
        %v2304 = vsub.f32 %v2208, %v2266
        %v2305 = vsub.f32 %v2209, %v2268
        %v2306 = vsub.f32 %v2210, %v2270
        %v2307 = vsub.f32 %v2211, %v2272
        %v2308 = vsub.f32 %v2212, %v2274
        %v2309 = vsub.f32 %v2213, %v2276
        %v2310 = vsub.f32 %v2214, %v2278
        %v2311 = vmul.f32 %v815, %v1398
        %v2312 = vmul.f32 %v818, %v1399
        %v2313 = vmul.f32 %v821, %v1400
        %v2314 = vmul.f32 %v824, %v1401
        %v2315 = vmul.f32 %v827, %v1402
        %v2316 = vmul.f32 %v830, %v1403
        %v2317 = vmul.f32 %v833, %v1404
        %v2318 = vmul.f32 %v836, %v1405
        %v2319 = vmul.f32 %v839, %v1406
        %v2320 = vmul.f32 %v842, %v1407
        %v2321 = vmul.f32 %v845, %v1408
        %v2322 = vmul.f32 %v848, %v1409
        %v2323 = vmul.f32 %v851, %v1410
        %v2324 = vmul.f32 %v854, %v1411
        %v2325 = vmul.f32 %v857, %v1412
        %v2326 = vmul.f32 %v860, %v1413
        %v2327 = vmul.f32 %v815, %v1623
        %v2328 = vmul.f32 %v818, %v1625
        %v2329 = vmul.f32 %v821, %v1627
        %v2330 = vmul.f32 %v824, %v1629
        %v2331 = vmul.f32 %v827, %v1631
        %v2332 = vmul.f32 %v830, %v1633
        %v2333 = vmul.f32 %v833, %v1635
        %v2334 = vmul.f32 %v836, %v1637
        %v2335 = vmul.f32 %v839, %v1639
        %v2336 = vmul.f32 %v842, %v1641
        %v2337 = vmul.f32 %v845, %v1643
        %v2338 = vmul.f32 %v848, %v1645
        %v2339 = vmul.f32 %v851, %v1647
        %v2340 = vmul.f32 %v854, %v1649
        %v2341 = vmul.f32 %v857, %v1651
        %v2342 = vmul.f32 %v860, %v1653
        %2359 = vrot.lane.b32.xlu0 %v2327, 64
        %v2360 = vpop.permute.xlu0 %2359
        %2361 = vrot.lane.b32.xlu0 %v2328, 64
        %v2362 = vpop.permute.xlu0 %2361
        %2363 = vrot.lane.b32.xlu0 %v2329, 64
        %v2364 = vpop.permute.xlu0 %2363
        %2365 = vrot.lane.b32.xlu0 %v2330, 64
        %v2366 = vpop.permute.xlu0 %2365
        %2367 = vrot.lane.b32.xlu0 %v2331, 64
        %v2368 = vpop.permute.xlu0 %2367
        %2369 = vrot.lane.b32.xlu0 %v2332, 64
        %v2370 = vpop.permute.xlu0 %2369
        %2371 = vrot.lane.b32.xlu0 %v2333, 64
        %v2372 = vpop.permute.xlu0 %2371
        %2373 = vrot.lane.b32.xlu0 %v2334, 64
        %v2374 = vpop.permute.xlu0 %2373
        %2375 = vrot.lane.b32.xlu0 %v2335, 64
        %v2376 = vpop.permute.xlu0 %2375
        %2377 = vrot.lane.b32.xlu0 %v2336, 64
        %v2378 = vpop.permute.xlu0 %2377
        %2379 = vrot.lane.b32.xlu0 %v2337, 64
        %v2380 = vpop.permute.xlu0 %2379
        %2381 = vrot.lane.b32.xlu0 %v2338, 64
        %v2382 = vpop.permute.xlu0 %2381
        %2383 = vrot.lane.b32.xlu0 %v2339, 64
        %v2384 = vpop.permute.xlu0 %2383
        %2385 = vrot.lane.b32.xlu0 %v2340, 64
        %v2386 = vpop.permute.xlu0 %2385
        %2387 = vrot.lane.b32.xlu0 %v2341, 64
        %v2388 = vpop.permute.xlu0 %2387
        %2389 = vrot.lane.b32.xlu0 %v2342, 64
        %v2390 = vpop.permute.xlu0 %2389
        %v2407 = vadd.f32 %v2311, %v2360
        %v2408 = vadd.f32 %v2312, %v2362
        %v2409 = vadd.f32 %v2313, %v2364
        %v2410 = vadd.f32 %v2314, %v2366
        %v2411 = vadd.f32 %v2315, %v2368
        %v2412 = vadd.f32 %v2316, %v2370
        %v2413 = vadd.f32 %v2317, %v2372
        %v2414 = vadd.f32 %v2318, %v2374
        %v2415 = vadd.f32 %v2319, %v2376
        %v2416 = vadd.f32 %v2320, %v2378
        %v2417 = vadd.f32 %v2321, %v2380
        %v2418 = vadd.f32 %v2322, %v2382
        %v2419 = vadd.f32 %v2323, %v2384
        %v2420 = vadd.f32 %v2324, %v2386
        %v2421 = vadd.f32 %v2325, %v2388
        %v2422 = vadd.f32 %v2326, %v2390
        %2439 = vrot.lane.b32.xlu0 %v2407, 64
        %v2440 = vpop.permute.xlu0 %2439
        %2441 = vrot.lane.b32.xlu0 %v2408, 64
        %v2442 = vpop.permute.xlu0 %2441
        %2443 = vrot.lane.b32.xlu0 %v2409, 64
        %v2444 = vpop.permute.xlu0 %2443
        %2445 = vrot.lane.b32.xlu0 %v2410, 64
        %v2446 = vpop.permute.xlu0 %2445
        %2447 = vrot.lane.b32.xlu0 %v2411, 64
        %v2448 = vpop.permute.xlu0 %2447
        %2449 = vrot.lane.b32.xlu0 %v2412, 64
        %v2450 = vpop.permute.xlu0 %2449
        %2451 = vrot.lane.b32.xlu0 %v2413, 64
        %v2452 = vpop.permute.xlu0 %2451
        %2453 = vrot.lane.b32.xlu0 %v2414, 64
        %v2454 = vpop.permute.xlu0 %2453
        %2455 = vrot.lane.b32.xlu0 %v2415, 64
        %v2456 = vpop.permute.xlu0 %2455
        %2457 = vrot.lane.b32.xlu0 %v2416, 64
        %v2458 = vpop.permute.xlu0 %2457
        %2459 = vrot.lane.b32.xlu0 %v2417, 64
        %v2460 = vpop.permute.xlu0 %2459
        %2461 = vrot.lane.b32.xlu0 %v2418, 64
        %v2462 = vpop.permute.xlu0 %2461
        %2463 = vrot.lane.b32.xlu0 %v2419, 64
        %v2464 = vpop.permute.xlu0 %2463
        %2465 = vrot.lane.b32.xlu0 %v2420, 64
        %v2466 = vpop.permute.xlu0 %2465
        %2467 = vrot.lane.b32.xlu0 %v2421, 64
        %v2468 = vpop.permute.xlu0 %2467
        %2469 = vrot.lane.b32.xlu0 %v2422, 64
        %v2470 = vpop.permute.xlu0 %2469
        %v2487 = vsel %vm1830, %v2295, %v2440
        %v2488 = vsel %vm1830, %v2296, %v2442
        %v2489 = vsel %vm1830, %v2297, %v2444
        %v2490 = vsel %vm1830, %v2298, %v2446
        %v2491 = vsel %vm1830, %v2299, %v2448
        %v2492 = vsel %vm1830, %v2300, %v2450
        %v2493 = vsel %vm1830, %v2301, %v2452
        %v2494 = vsel %vm1830, %v2302, %v2454
        %v2495 = vsel %vm1830, %v2303, %v2456
        %v2496 = vsel %vm1830, %v2304, %v2458
        %v2497 = vsel %vm1830, %v2305, %v2460
        %v2498 = vsel %vm1830, %v2306, %v2462
        %v2499 = vsel %vm1830, %v2307, %v2464
        %v2500 = vsel %vm1830, %v2308, %v2466
        %v2501 = vsel %vm1830, %v2309, %v2468
        %v2502 = vsel %vm1830, %v2310, %v2470
        %s2503 = scalar_lea.vmem %s347, 128 [#allocation7]
        %2504 = vst [vmem:[%s2503] sm:$0xff] %v2487
        %2505 = vst [vmem:[%s2503 + $0x8] sm:$0xff] %v2488
        %2506 = vst [vmem:[%s2503 + $0x10] sm:$0xff] %v2489
        %2507 = vst [vmem:[%s2503 + $0x18] sm:$0xff] %v2490
        %2508 = vst [vmem:[%s2503 + $0x20] sm:$0xff] %v2491
        %2509 = vst [vmem:[%s2503 + $0x28] sm:$0xff] %v2492
        %2510 = vst [vmem:[%s2503 + $0x30] sm:$0xff] %v2493
        %2511 = vst [vmem:[%s2503 + $0x38] sm:$0xff] %v2494
        %2512 = vst [vmem:[%s2503 + $0x40] sm:$0xff] %v2495
        %2513 = vst [vmem:[%s2503 + $0x48] sm:$0xff] %v2496
        %2514 = vst [vmem:[%s2503 + $0x50] sm:$0xff] %v2497
        %2515 = vst [vmem:[%s2503 + $0x58] sm:$0xff] %v2498
        %2516 = vst [vmem:[%s2503 + $0x60] sm:$0xff] %v2499
        %2517 = vst [vmem:[%s2503 + $0x68] sm:$0xff] %v2500
        %2518 = vst [vmem:[%s2503 + $0x70] sm:$0xff] %v2501
        %2519 = vst [vmem:[%s2503 + $0x78] sm:$0xff] %v2502
        %v2520 = vmul.f32 %v1075, %v1382
        %v2521 = vmul.f32 %v1078, %v1383
        %v2522 = vmul.f32 %v1081, %v1384
        %v2523 = vmul.f32 %v1084, %v1385
        %v2524 = vmul.f32 %v1087, %v1386
        %v2525 = vmul.f32 %v1090, %v1387
        %v2526 = vmul.f32 %v1093, %v1388
        %v2527 = vmul.f32 %v1096, %v1389
        %v2528 = vmul.f32 %v1099, %v1390
        %v2529 = vmul.f32 %v1102, %v1391
        %v2530 = vmul.f32 %v1105, %v1392
        %v2531 = vmul.f32 %v1108, %v1393
        %v2532 = vmul.f32 %v1111, %v1394
        %v2533 = vmul.f32 %v1114, %v1395
        %v2534 = vmul.f32 %v1117, %v1396
        %v2535 = vmul.f32 %v1120, %v1397
        %v2536 = vmul.f32 %v1075, %v1447
        %v2537 = vmul.f32 %v1078, %v1449
        %v2538 = vmul.f32 %v1081, %v1451
        %v2539 = vmul.f32 %v1084, %v1453
        %v2540 = vmul.f32 %v1087, %v1455
        %v2541 = vmul.f32 %v1090, %v1457
        %v2542 = vmul.f32 %v1093, %v1459
        %v2543 = vmul.f32 %v1096, %v1461
        %v2544 = vmul.f32 %v1099, %v1463
        %v2545 = vmul.f32 %v1102, %v1465
        %v2546 = vmul.f32 %v1105, %v1467
        %v2547 = vmul.f32 %v1108, %v1469
        %v2548 = vmul.f32 %v1111, %v1471
        %v2549 = vmul.f32 %v1114, %v1473
        %v2550 = vmul.f32 %v1117, %v1475
        %v2551 = vmul.f32 %v1120, %v1477
        %2568 = vrot.lane.b32.xlu0 %v2536, 64
        %v2569 = vpop.permute.xlu0 %2568
        %2570 = vrot.lane.b32.xlu0 %v2537, 64
        %v2571 = vpop.permute.xlu0 %2570
        %2572 = vrot.lane.b32.xlu0 %v2538, 64
        %v2573 = vpop.permute.xlu0 %2572
        %2574 = vrot.lane.b32.xlu0 %v2539, 64
        %v2575 = vpop.permute.xlu0 %2574
        %2576 = vrot.lane.b32.xlu0 %v2540, 64
        %v2577 = vpop.permute.xlu0 %2576
        %2578 = vrot.lane.b32.xlu0 %v2541, 64
        %v2579 = vpop.permute.xlu0 %2578
        %2580 = vrot.lane.b32.xlu0 %v2542, 64
        %v2581 = vpop.permute.xlu0 %2580
        %2582 = vrot.lane.b32.xlu0 %v2543, 64
        %v2583 = vpop.permute.xlu0 %2582
        %2584 = vrot.lane.b32.xlu0 %v2544, 64
        %v2585 = vpop.permute.xlu0 %2584
        %2586 = vrot.lane.b32.xlu0 %v2545, 64
        %v2587 = vpop.permute.xlu0 %2586
        %2588 = vrot.lane.b32.xlu0 %v2546, 64
        %v2589 = vpop.permute.xlu0 %2588
        %2590 = vrot.lane.b32.xlu0 %v2547, 64
        %v2591 = vpop.permute.xlu0 %2590
        %2592 = vrot.lane.b32.xlu0 %v2548, 64
        %v2593 = vpop.permute.xlu0 %2592
        %2594 = vrot.lane.b32.xlu0 %v2549, 64
        %v2595 = vpop.permute.xlu0 %2594
        %2596 = vrot.lane.b32.xlu0 %v2550, 64
        %v2597 = vpop.permute.xlu0 %2596
        %2598 = vrot.lane.b32.xlu0 %v2551, 64
        %v2599 = vpop.permute.xlu0 %2598
        %v2616 = vsub.f32 %v2520, %v2569
        %v2617 = vsub.f32 %v2521, %v2571
        %v2618 = vsub.f32 %v2522, %v2573
        %v2619 = vsub.f32 %v2523, %v2575
        %v2620 = vsub.f32 %v2524, %v2577
        %v2621 = vsub.f32 %v2525, %v2579
        %v2622 = vsub.f32 %v2526, %v2581
        %v2623 = vsub.f32 %v2527, %v2583
        %v2624 = vsub.f32 %v2528, %v2585
        %v2625 = vsub.f32 %v2529, %v2587
        %v2626 = vsub.f32 %v2530, %v2589
        %v2627 = vsub.f32 %v2531, %v2591
        %v2628 = vsub.f32 %v2532, %v2593
        %v2629 = vsub.f32 %v2533, %v2595
        %v2630 = vsub.f32 %v2534, %v2597
        %v2631 = vsub.f32 %v2535, %v2599
        %v2632 = vmul.f32 %v1075, %v1398
        %v2633 = vmul.f32 %v1078, %v1399
        %v2634 = vmul.f32 %v1081, %v1400
        %v2635 = vmul.f32 %v1084, %v1401
        %v2636 = vmul.f32 %v1087, %v1402
        %v2637 = vmul.f32 %v1090, %v1403
        %v2638 = vmul.f32 %v1093, %v1404
        %v2639 = vmul.f32 %v1096, %v1405
        %v2640 = vmul.f32 %v1099, %v1406
        %v2641 = vmul.f32 %v1102, %v1407
        %v2642 = vmul.f32 %v1105, %v1408
        %v2643 = vmul.f32 %v1108, %v1409
        %v2644 = vmul.f32 %v1111, %v1410
        %v2645 = vmul.f32 %v1114, %v1411
        %v2646 = vmul.f32 %v1117, %v1412
        %v2647 = vmul.f32 %v1120, %v1413
        %v2648 = vmul.f32 %v1075, %v1623
        %v2649 = vmul.f32 %v1078, %v1625
        %v2650 = vmul.f32 %v1081, %v1627
        %v2651 = vmul.f32 %v1084, %v1629
        %v2652 = vmul.f32 %v1087, %v1631
        %v2653 = vmul.f32 %v1090, %v1633
        %v2654 = vmul.f32 %v1093, %v1635
        %v2655 = vmul.f32 %v1096, %v1637
        %v2656 = vmul.f32 %v1099, %v1639
        %v2657 = vmul.f32 %v1102, %v1641
        %v2658 = vmul.f32 %v1105, %v1643
        %v2659 = vmul.f32 %v1108, %v1645
        %v2660 = vmul.f32 %v1111, %v1647
        %v2661 = vmul.f32 %v1114, %v1649
        %v2662 = vmul.f32 %v1117, %v1651
        %v2663 = vmul.f32 %v1120, %v1653
        %2680 = vrot.lane.b32.xlu0 %v2648, 64
        %v2681 = vpop.permute.xlu0 %2680
        %2682 = vrot.lane.b32.xlu0 %v2649, 64
        %v2683 = vpop.permute.xlu0 %2682
        %2684 = vrot.lane.b32.xlu0 %v2650, 64
        %v2685 = vpop.permute.xlu0 %2684
        %2686 = vrot.lane.b32.xlu0 %v2651, 64
        %v2687 = vpop.permute.xlu0 %2686
        %2688 = vrot.lane.b32.xlu0 %v2652, 64
        %v2689 = vpop.permute.xlu0 %2688
        %2690 = vrot.lane.b32.xlu0 %v2653, 64
        %v2691 = vpop.permute.xlu0 %2690
        %2692 = vrot.lane.b32.xlu0 %v2654, 64
        %v2693 = vpop.permute.xlu0 %2692
        %2694 = vrot.lane.b32.xlu0 %v2655, 64
        %v2695 = vpop.permute.xlu0 %2694
        %2696 = vrot.lane.b32.xlu0 %v2656, 64
        %v2697 = vpop.permute.xlu0 %2696
        %2698 = vrot.lane.b32.xlu0 %v2657, 64
        %v2699 = vpop.permute.xlu0 %2698
        %2700 = vrot.lane.b32.xlu0 %v2658, 64
        %v2701 = vpop.permute.xlu0 %2700
        %2702 = vrot.lane.b32.xlu0 %v2659, 64
        %v2703 = vpop.permute.xlu0 %2702
        %2704 = vrot.lane.b32.xlu0 %v2660, 64
        %v2705 = vpop.permute.xlu0 %2704
        %2706 = vrot.lane.b32.xlu0 %v2661, 64
        %v2707 = vpop.permute.xlu0 %2706
        %2708 = vrot.lane.b32.xlu0 %v2662, 64
        %v2709 = vpop.permute.xlu0 %2708
        %2710 = vrot.lane.b32.xlu0 %v2663, 64
        %v2711 = vpop.permute.xlu0 %2710
        %v2728 = vadd.f32 %v2632, %v2681
        %v2729 = vadd.f32 %v2633, %v2683
        %v2730 = vadd.f32 %v2634, %v2685
        %v2731 = vadd.f32 %v2635, %v2687
        %v2732 = vadd.f32 %v2636, %v2689
        %v2733 = vadd.f32 %v2637, %v2691
        %v2734 = vadd.f32 %v2638, %v2693
        %v2735 = vadd.f32 %v2639, %v2695
        %v2736 = vadd.f32 %v2640, %v2697
        %v2737 = vadd.f32 %v2641, %v2699
        %v2738 = vadd.f32 %v2642, %v2701
        %v2739 = vadd.f32 %v2643, %v2703
        %v2740 = vadd.f32 %v2644, %v2705
        %v2741 = vadd.f32 %v2645, %v2707
        %v2742 = vadd.f32 %v2646, %v2709
        %v2743 = vadd.f32 %v2647, %v2711
        %2760 = vrot.lane.b32.xlu0 %v2728, 64
        %v2761 = vpop.permute.xlu0 %2760
        %2762 = vrot.lane.b32.xlu0 %v2729, 64
        %v2763 = vpop.permute.xlu0 %2762
        %2764 = vrot.lane.b32.xlu0 %v2730, 64
        %v2765 = vpop.permute.xlu0 %2764
        %2766 = vrot.lane.b32.xlu0 %v2731, 64
        %v2767 = vpop.permute.xlu0 %2766
        %2768 = vrot.lane.b32.xlu0 %v2732, 64
        %v2769 = vpop.permute.xlu0 %2768
        %2770 = vrot.lane.b32.xlu0 %v2733, 64
        %v2771 = vpop.permute.xlu0 %2770
        %2772 = vrot.lane.b32.xlu0 %v2734, 64
        %v2773 = vpop.permute.xlu0 %2772
        %2774 = vrot.lane.b32.xlu0 %v2735, 64
        %v2775 = vpop.permute.xlu0 %2774
        %2776 = vrot.lane.b32.xlu0 %v2736, 64
        %v2777 = vpop.permute.xlu0 %2776
        %2778 = vrot.lane.b32.xlu0 %v2737, 64
        %v2779 = vpop.permute.xlu0 %2778
        %2780 = vrot.lane.b32.xlu0 %v2738, 64
        %v2781 = vpop.permute.xlu0 %2780
        %2782 = vrot.lane.b32.xlu0 %v2739, 64
        %v2783 = vpop.permute.xlu0 %2782
        %2784 = vrot.lane.b32.xlu0 %v2740, 64
        %v2785 = vpop.permute.xlu0 %2784
        %2786 = vrot.lane.b32.xlu0 %v2741, 64
        %v2787 = vpop.permute.xlu0 %2786
        %2788 = vrot.lane.b32.xlu0 %v2742, 64
        %v2789 = vpop.permute.xlu0 %2788
        %2790 = vrot.lane.b32.xlu0 %v2743, 64
        %v2791 = vpop.permute.xlu0 %2790
        %v2808 = vsel %vm1830, %v2616, %v2761
        %v2809 = vsel %vm1830, %v2617, %v2763
        %v2810 = vsel %vm1830, %v2618, %v2765
        %v2811 = vsel %vm1830, %v2619, %v2767
        %v2812 = vsel %vm1830, %v2620, %v2769
        %v2813 = vsel %vm1830, %v2621, %v2771
        %v2814 = vsel %vm1830, %v2622, %v2773
        %v2815 = vsel %vm1830, %v2623, %v2775
        %v2816 = vsel %vm1830, %v2624, %v2777
        %v2817 = vsel %vm1830, %v2625, %v2779
        %v2818 = vsel %vm1830, %v2626, %v2781
        %v2819 = vsel %vm1830, %v2627, %v2783
        %v2820 = vsel %vm1830, %v2628, %v2785
        %v2821 = vsel %vm1830, %v2629, %v2787
        %v2822 = vsel %vm1830, %v2630, %v2789
        %v2823 = vsel %vm1830, %v2631, %v2791
        %s2824 = scalar_lea.vmem %s354, 128 [#allocation8]
        %2825 = vst [vmem:[%s2824] sm:$0xff] %v2808
        %2826 = vst [vmem:[%s2824 + $0x8] sm:$0xff] %v2809
        %2827 = vst [vmem:[%s2824 + $0x10] sm:$0xff] %v2810
        %2828 = vst [vmem:[%s2824 + $0x18] sm:$0xff] %v2811
        %2829 = vst [vmem:[%s2824 + $0x20] sm:$0xff] %v2812
        %2830 = vst [vmem:[%s2824 + $0x28] sm:$0xff] %v2813
        %2831 = vst [vmem:[%s2824 + $0x30] sm:$0xff] %v2814
        %2832 = vst [vmem:[%s2824 + $0x38] sm:$0xff] %v2815
        %2833 = vst [vmem:[%s2824 + $0x40] sm:$0xff] %v2816
        %2834 = vst [vmem:[%s2824 + $0x48] sm:$0xff] %v2817
        %2835 = vst [vmem:[%s2824 + $0x50] sm:$0xff] %v2818
        %2836 = vst [vmem:[%s2824 + $0x58] sm:$0xff] %v2819
        %2837 = vst [vmem:[%s2824 + $0x60] sm:$0xff] %v2820
        %2838 = vst [vmem:[%s2824 + $0x68] sm:$0xff] %v2821
        %2839 = vst [vmem:[%s2824 + $0x70] sm:$0xff] %v2822
        %2840 = vst [vmem:[%s2824 + $0x78] sm:$0xff] %v2823
        %s2841 = scalar_lea.vmem %s361, 128 [#allocation10]
        %2842 = vst [vmem:[%s2841] sm:$0xff] %v1335
        %2843 = vst [vmem:[%s2841 + $0x8] sm:$0xff] %v1338
        %2844 = vst [vmem:[%s2841 + $0x10] sm:$0xff] %v1341
        %2845 = vst [vmem:[%s2841 + $0x18] sm:$0xff] %v1344
        %2846 = vst [vmem:[%s2841 + $0x20] sm:$0xff] %v1347
        %2847 = vst [vmem:[%s2841 + $0x28] sm:$0xff] %v1350
        %2848 = vst [vmem:[%s2841 + $0x30] sm:$0xff] %v1353
        %2849 = vst [vmem:[%s2841 + $0x38] sm:$0xff] %v1356
        %2850 = vst [vmem:[%s2841 + $0x40] sm:$0xff] %v1359
        %2851 = vst [vmem:[%s2841 + $0x48] sm:$0xff] %v1362
        %2852 = vst [vmem:[%s2841 + $0x50] sm:$0xff] %v1365
        %2853 = vst [vmem:[%s2841 + $0x58] sm:$0xff] %v1368
        %2854 = vst [vmem:[%s2841 + $0x60] sm:$0xff] %v1371
        %2855 = vst [vmem:[%s2841 + $0x68] sm:$0xff] %v1374
        %2856 = vst [vmem:[%s2841 + $0x70] sm:$0xff] %v1377
        %2857 = vst [vmem:[%s2841 + $0x78] sm:$0xff] %v1380
        %s2858 = sand.u32 %s151, 1
        %s2859 = scalar_lea.sflag [#allocation4], %s2858
        %s2860 = sand.u32 %s151, 1
        %s2861 = smul.addr %s2860, 256
        %s2862 = scalar_lea.vmem [#allocation7], %s2861
        %s2863 = sand.u32 %s28, 1
        %s2864 = scalar_lea.sflag [#allocation9], %s2863
        %s2865 = sand.u32 %s179, 1
        %s2866 = smul.addr %s2865, 256
        %s2867 = scalar_lea.vmem [#allocation8], %s2866
        %s2868 = sand.u32 %s28, 1
        %s2869 = scalar_lea.sflag [#allocation9], %s2868
        %s2870 = sand.u32 %s207, 1
        %s2871 = smul.addr %s2870, 256
        %s2872 = scalar_lea.vmem [#allocation10], %s2871
        // Predicated region
        $region45: #{tpu_custom_call.1} parent=35 // pred_check
          %p2873 = pneg %p161
        $region46: #{tpu_custom_call.1} parent=35 // pred_check_branch
          %2875 = sbr.rel (%p2873) target = $region48
        $region47: #{tpu_custom_call.1} parent=35 // pred_region
          #allocation12 [shape = 'u32[6]{0}', space=smem, size = 0x18, scoped, tag = 'DMA stride descriptor']
          %s2876 = smul.u32 16, %s33
          %2878 = vsyncadd %s2859, 0
          %s2879 = smul.addr %s32, 64
          %s2880 = sadd.s32 %s2876, %s2879
          %s2881 = smul.addr %s2880, 8
          %s2882 = scalar_lea.hbm %s4, %s2881
          %s2884 = sshll.u32 1, 14
          %s2885 = sxor.u32 4294967295, %s2884
          %s2888 = sshll.u32 7, 18
          %s2889 = sxor.u32 4294967295, %s2888
          %s2890 = sand.u32 0, %s2889
          %s2892 = sor.u32 %s2890, 0
          %s2893 = sshll.u32 %s2862, 4
          %s2894 = int_to_ptr.vmem [resolvable:$true] %s2893
          %s2895 = sshll.u32 %s2882, 4
          %s2896 = int_to_ptr.hbm [resolvable:$true] %s2895
          %2902 = sst [smem:[#allocation12]] 2048
          %s2903 = scalar_lea.smem [#allocation12], 1
          %2904 = sst [smem:[%s2903]] 4096
          %s2905 = scalar_lea.smem [#allocation12], 2
          %2906 = sst [smem:[%s2905]] 16
          %s2907 = scalar_lea.smem [#allocation12], 3
          %2908 = sst [smem:[%s2907]] 128
          %s2909 = scalar_lea.smem [#allocation12], 4
          %2910 = sst [smem:[%s2909]] 128
          %s2911 = scalar_lea.smem [#allocation12], 5
          %2912 = sst [smem:[%s2911]] 8
          %2914 = dma.general %s2894, 4096, %s2896, %s2859, [#allocation11], [#allocation12], %s2892, 0
        $region48: #{tpu_custom_call.1} parent=35 // pred_fallthru
          _
        // Predicated region
        $region49: #{tpu_custom_call.1} parent=35 // pred_check
          %p2915 = pneg %p189
        $region50: #{tpu_custom_call.1} parent=35 // pred_check_branch
          %2917 = sbr.rel (%p2915) target = $region52
        $region51: #{tpu_custom_call.1} parent=35 // pred_region
          #allocation14 [shape = 'u32[6]{0}', space=smem, size = 0x18, scoped, tag = 'DMA stride descriptor']
          %s2918 = smul.u32 16, %s33
          %2920 = vsyncadd %s2864, 0
          %s2921 = smul.addr %s32, 64
          %s2922 = sadd.s32 %s2918, %s2921
          %s2923 = smul.addr %s2922, 8
          %s2924 = scalar_lea.hbm %s5, %s2923
          %s2926 = sshll.u32 1, 14
          %s2927 = sxor.u32 4294967295, %s2926
          %s2930 = sshll.u32 7, 18
          %s2931 = sxor.u32 4294967295, %s2930
          %s2932 = sand.u32 0, %s2931
          %s2934 = sor.u32 %s2932, 0
          %s2935 = sshll.u32 %s2867, 4
          %s2936 = int_to_ptr.vmem [resolvable:$true] %s2935
          %s2937 = sshll.u32 %s2924, 4
          %s2938 = int_to_ptr.hbm [resolvable:$true] %s2937
          %2944 = sst [smem:[#allocation14]] 2048
          %s2945 = scalar_lea.smem [#allocation14], 1
          %2946 = sst [smem:[%s2945]] 4096
          %s2947 = scalar_lea.smem [#allocation14], 2
          %2948 = sst [smem:[%s2947]] 16
          %s2949 = scalar_lea.smem [#allocation14], 3
          %2950 = sst [smem:[%s2949]] 128
          %s2951 = scalar_lea.smem [#allocation14], 4
          %2952 = sst [smem:[%s2951]] 128
          %s2953 = scalar_lea.smem [#allocation14], 5
          %2954 = sst [smem:[%s2953]] 8
          %2956 = dma.general %s2936, 4096, %s2938, %s2864, [#allocation13], [#allocation14], %s2934, 0
        $region52: #{tpu_custom_call.1} parent=35 // pred_fallthru
          _
        // Predicated region
        $region53: #{tpu_custom_call.1} parent=35 // pred_check
          %p2957 = pneg %p217
        $region54: #{tpu_custom_call.1} parent=35 // pred_check_branch
          %2959 = sbr.rel (%p2957) target = $region56
        $region55: #{tpu_custom_call.1} parent=35 // pred_region
          #allocation16 [shape = 'u32[6]{0}', space=smem, size = 0x18, scoped, tag = 'DMA stride descriptor']
          %s2960 = smul.u32 16, %s33
          %2962 = vsyncadd %s2869, 0
          %s2963 = smul.addr %s32, 64
          %s2964 = sadd.s32 %s2960, %s2963
          %s2965 = smul.addr %s2964, 8
          %s2966 = scalar_lea.hbm %s6, %s2965
          %s2968 = sshll.u32 1, 14
          %s2969 = sxor.u32 4294967295, %s2968
          %s2972 = sshll.u32 7, 18
          %s2973 = sxor.u32 4294967295, %s2972
          %s2974 = sand.u32 0, %s2973
          %s2976 = sor.u32 %s2974, 0
          %s2977 = sshll.u32 %s2872, 4
          %s2978 = int_to_ptr.vmem [resolvable:$true] %s2977
          %s2979 = sshll.u32 %s2966, 4
          %s2980 = int_to_ptr.hbm [resolvable:$true] %s2979
          %2986 = sst [smem:[#allocation16]] 2048
          %s2987 = scalar_lea.smem [#allocation16], 1
          %2988 = sst [smem:[%s2987]] 4096
          %s2989 = scalar_lea.smem [#allocation16], 2
          %2990 = sst [smem:[%s2989]] 16
          %s2991 = scalar_lea.smem [#allocation16], 3
          %2992 = sst [smem:[%s2991]] 128
          %s2993 = scalar_lea.smem [#allocation16], 4
          %2994 = sst [smem:[%s2993]] 128
          %s2995 = scalar_lea.smem [#allocation16], 5
          %2996 = sst [smem:[%s2995]] 8
          %2998 = dma.general %s2978, 4096, %s2980, %s2869, [#allocation15], [#allocation16], %s2976, 0
        $region56: #{tpu_custom_call.1} parent=35 // pred_fallthru
          _
      $region36: #{tpu_custom_call.1} parent=5 // pred_fallthru
        _
      %p2999 = scmp.le.s32.totalorder 2, %s23
      // Predicated region
      $region57: #{tpu_custom_call.1} parent=5 // pred_check
        %p3000 = pneg %p2999
      $region58: #{tpu_custom_call.1} parent=5 // pred_check_branch
        %3002 = sbr.rel (%p3000) target = $region60
      $region59: #{tpu_custom_call.1} parent=5 // pred_region
        %s3003 = ssub.s32 %s23, 2
        // Predicated region
        $region61: #{tpu_custom_call.1} parent=59 // pred_check
          %p3004 = pneg %p167
        $region62: #{tpu_custom_call.1} parent=59 // pred_check_branch
          %3006 = sbr.rel (%p3004) target = $region64
        $region63: #{tpu_custom_call.1} parent=59 // pred_region
          %s3007 = sand.u32 %s152, 1
          %s3008 = scalar_lea.sflag [#allocation4], %s3007
          %s3009 = sand.u32 %s152, 1
          %s3010 = smul.addr %s3009, 256
          %s3011 = scalar_lea.vmem [#allocation7], %s3010
          %3013 = dma.done %s3008, 4096
        $region64: #{tpu_custom_call.1} parent=59 // pred_fallthru
          _
        // Predicated region
        $region65: #{tpu_custom_call.1} parent=59 // pred_check
          %p3014 = pneg %p195
        $region66: #{tpu_custom_call.1} parent=59 // pred_check_branch
          %3016 = sbr.rel (%p3014) target = $region68
        $region67: #{tpu_custom_call.1} parent=59 // pred_region
          %s3017 = sand.u32 %s29, 1
          %s3018 = scalar_lea.sflag [#allocation9], %s3017
          %s3019 = sand.u32 %s180, 1
          %s3020 = smul.addr %s3019, 256
          %s3021 = scalar_lea.vmem [#allocation8], %s3020
          %3023 = dma.done %s3018, 4096
        $region68: #{tpu_custom_call.1} parent=59 // pred_fallthru
          _
        // Predicated region
        $region69: #{tpu_custom_call.1} parent=59 // pred_check
          %p3024 = pneg %p223
        $region70: #{tpu_custom_call.1} parent=59 // pred_check_branch
          %3026 = sbr.rel (%p3024) target = $region72
        $region71: #{tpu_custom_call.1} parent=59 // pred_region
          %s3027 = sand.u32 %s29, 1
          %s3028 = scalar_lea.sflag [#allocation9], %s3027
          %s3029 = sand.u32 %s208, 1
          %s3030 = smul.addr %s3029, 256
          %s3031 = scalar_lea.vmem [#allocation10], %s3030
          %3033 = dma.done %s3028, 4096
        $region72: #{tpu_custom_call.1} parent=59 // pred_fallthru
          _
      $region60: #{tpu_custom_call.1} parent=5 // pred_fallthru
        _
    $region6: #{tpu_custom_call.1} parent=1 // loop_footer
      %s27 = sadd.s32 1, %s23
    $region7: #{tpu_custom_call.1} parent=1 // loop_footer_branch
      %22 = sbr.rel target = $region3
    $region8: #{tpu_custom_call.1} parent=1 // loop_exit
      _
    %3034 = vsyncpa [#allocation3], 1
    %s3035 = scalar_lea.sflag [#allocation3], 1
    %3036 = vsyncpa %s3035, 1
    %3037 = vsyncpa [#allocation6], 1
    %3038 = vsyncpa [#allocation4], 1
    %s3039 = scalar_lea.sflag [#allocation4], 1
    %3040 = vsyncpa %s3039, 1
    %3041 = vsyncpa [#allocation9], 1
    %s3042 = scalar_lea.sflag [#allocation9], 1
    %3043 = vsyncpa %s3042, 1

</llo_original>
